<compile_context>
chip_gen: v7x
topology: tpu7x:2x2x1
jax: 0.10.0
libtpu: 0.0.40
codegen_flags: <defaults>
</compile_context>

<pallas_src>
import functools

import jax
import jax.numpy as jnp
from jax import lax
from jax.experimental import pallas as pl
from jax.experimental.pallas import tpu as pltpu


def _round_up(a, b):
    return (a + b - 1) // b * b


# ---------------------------------------------------------------------------
# Fused kernel: (tm, dim) @ (dim, 4c) expand  +  LayerNorm over each c-group
# ---------------------------------------------------------------------------
def _expand_ln_kernel(x_ref, w_ref, g_ref, b_ref, o_ref, *, c, eps):
    # MXU matmul, f32 accumulate.
    y = jnp.dot(x_ref[...], w_ref[...], preferred_element_type=jnp.float32)  # (tm, 4c)

    gamma = g_ref[...]  # (1, c) f32
    beta = b_ref[...]   # (1, c) f32

    parts = []
    for g in range(4):  # static unrolled; group g corresponds to (p1*2 + p2)
        yg = y[:, g * c:(g + 1) * c]
        mean = jnp.mean(yg, axis=-1, keepdims=True)
        d = yg - mean
        var = jnp.mean(d * d, axis=-1, keepdims=True)   # biased var (nn.LayerNorm)
        inv = lax.rsqrt(var + eps)                      # EUP slot, not VALU divide
        parts.append(d * inv * gamma + beta)

    # Single lane-dense store of the whole (tm, 4c) tile.
    o_ref[...] = jnp.concatenate(parts, axis=-1).astype(o_ref.dtype)


# ---------------------------------------------------------------------------
# Parameters (matches nn.Linear(dim, 2*dim, bias=False) + nn.LayerNorm(dim//2))
# ---------------------------------------------------------------------------
def init_params(key, dim, dim_scale=2):
    # TODO(synk): dim_scale != 2 uses nn.Identity for expand; only the standard
    # dim_scale == 2 path is implemented here.
    assert dim_scale == 2
    c = dim // dim_scale
    k1, k2, k3 = jax.random.split(key, 3)
    return {
        # nn.Linear weight is (2*dim, dim); we store its transpose (dim, 2*dim).
        'expand_wt': (jax.random.normal(k1, (dim, 2 * dim), jnp.float32)
                      * (1.0 / jnp.sqrt(dim))),
        # nn.LayerNorm default init is weight=1 / bias=0; perturb slightly so
        # the affine path is actually exercised by the test.
        'norm_w': 1.0 + 0.1 * jax.random.normal(k2, (c,), jnp.float32),
        'norm_b': 0.01 * jax.random.normal(k3, (c,), jnp.float32),
    }


# ---------------------------------------------------------------------------
# Forward
# ---------------------------------------------------------------------------
def patch_expand_forward(params, x, *, eps=1e-5, tm=256,
                         matmul_dtype=jnp.bfloat16):
    """x: (B, dim, H, W)  ->  (B, 4*H*W, dim // 2)  (same as the PyTorch module)."""
    B, dim, H, W = x.shape
    assert dim % 2 == 0
    c = dim // 2

    wt = params['expand_wt']                                   # (dim, 2*dim)
    gamma = params['norm_w'].reshape(1, c).astype(jnp.float32)
    beta = params['norm_b'].reshape(1, c).astype(jnp.float32)

    # NCHW -> NHWC once; rows = (b, h, w), channels on lanes.
    xf = jnp.transpose(x, (0, 2, 3, 1)).reshape(B * H * W, dim)
    M = B * H * W

    tm = min(tm, _round_up(M, 8))
    Mpad = _round_up(M, tm)
    if Mpad != M:
        xf = jnp.pad(xf, ((0, Mpad - M), (0, 0)))

    kernel = functools.partial(_expand_ln_kernel, c=c, eps=eps)
    y = pl.pallas_call(
        kernel,
        out_shape=jax.ShapeDtypeStruct((Mpad, 2 * dim), jnp.float32),
        grid_spec=pltpu.PrefetchScalarGridSpec(
            num_scalar_prefetch=0,
            grid=(Mpad // tm,),
            in_specs=[
                pl.BlockSpec((tm, dim), lambda i: (i, 0)),        # activations
                pl.BlockSpec((dim, 2 * dim), lambda i: (0, 0)),   # expand weight
                pl.BlockSpec((1, c), lambda i: (0, 0)),           # LN gamma
                pl.BlockSpec((1, c), lambda i: (0, 0)),           # LN beta
            ],
            out_specs=pl.BlockSpec((tm, 2 * dim), lambda i: (i, 0)),
        ),
        compiler_params=pltpu.CompilerParams(
            dimension_semantics=("parallel",)),
    )(xf.astype(matmul_dtype), wt.astype(matmul_dtype), gamma, beta)

    y = y[:M]
    # rearrange 'b h w (p1 p2 c) -> b (h p1) (w p2) c' + flatten spatial.
    # (Pure layout glue, left to XLA.)
    y = y.reshape(B, H, W, 2, 2, c)
    y = jnp.transpose(y, (0, 1, 3, 2, 4, 5)).reshape(B, 2 * H, 2 * W, c)
    return y.reshape(B, 4 * H * W, c)


# ---------------------------------------------------------------------------
# Self-test
# ---------------------------------------------------------------------------
if __name__ == "__main__":
    key = jax.random.PRNGKey(0)
    B, dim, H, W = 2, 64, 16, 16

    kx, kp = jax.random.split(key)
    x = jax.random.normal(kx, (B, dim, H, W), jnp.float32)
    params = init_params(kp, dim)

    out = patch_expand_forward(params, x)
    out = jax.block_until_ready(out)

    assert out.shape == (B, 4 * H * W, dim // 2), out.shape
    assert bool(jnp.all(jnp.isfinite(out)))

    # Pure-JAX f32 reference (loose tolerance: kernel matmul operands are bf16).
    def ref(params, x):
        xh = jnp.transpose(x, (0, 2, 3, 1))
        y = jnp.einsum('bhwc,cd->bhwd', xh, params['expand_wt'])
        Bq, Hq, Wq, C2 = y.shape
        cq = C2 // 4
        y = y.reshape(Bq, Hq, Wq, 2, 2, cq)
        y = jnp.transpose(y, (0, 1, 3, 2, 4, 5)).reshape(Bq, 2 * Hq, 2 * Wq, cq)
        y = y.reshape(Bq, 4 * Hq * Wq, cq)
        mu = jnp.mean(y, axis=-1, keepdims=True)
        var = jnp.mean((y - mu) ** 2, axis=-1, keepdims=True)
        return (y - mu) / jnp.sqrt(var + 1e-5) * params['norm_w'] + params['norm_b']

    err = float(jnp.max(jnp.abs(out - ref(params, x))))
    assert err < 0.15, err

    print("KERNEL_OK")
</pallas_src>

<mosaic_0001>
module attributes {stable_mosaic.version = 11 : i64} {
  func.func @_expand_ln_kernel(%arg0: i32, %arg1: memref<256x64xbf16, #tpu.memory_space<vmem>>, %arg2: memref<64x128xbf16, #tpu.memory_space<vmem>>, %arg3: memref<1x32xf32, #tpu.memory_space<vmem>>, %arg4: memref<1x32xf32, #tpu.memory_space<vmem>>, %arg5: memref<256x128xf32, #tpu.memory_space<vmem>>) attributes {dimension_semantics = [#tpu.dimension_semantics<parallel>], iteration_bounds = array<i64: 2>, scalar_prefetch = 0 : i64, scratch_operands = 0 : i64, tpu.core_type = #tpu.core_type<tc>, window_params = [{transform_indices = @transform_0, window_bounds = array<i64: 256, 64>}, {pipeline_mode = #tpu.pipeline_mode<synchronous>, transform_indices = @transform_1, window_bounds = array<i64: 64, 128>}, {pipeline_mode = #tpu.pipeline_mode<synchronous>, transform_indices = @transform_2, window_bounds = array<i64: 1, 32>}, {pipeline_mode = #tpu.pipeline_mode<synchronous>, transform_indices = @transform_3, window_bounds = array<i64: 1, 32>}, {transform_indices = @transform_4, window_bounds = array<i64: 256, 128>}]} {
    %c0 = arith.constant 0 : index
    %c0_0 = arith.constant 0 : index
    %0 = vector.load %arg1[%c0, %c0_0] : memref<256x64xbf16, #tpu.memory_space<vmem>>, vector<256x64xbf16>
    %c0_1 = arith.constant 0 : index
    %c0_2 = arith.constant 0 : index
    %1 = vector.load %arg2[%c0_1, %c0_2] : memref<64x128xbf16, #tpu.memory_space<vmem>>, vector<64x128xbf16>
    %cst = arith.constant dense<0.000000e+00> : vector<256x128xf32>
    %2 = tpu.matmul %0, %1, %cst {dimension_numbers = #tpu.dot_dimension_numbers<[1], [0], [0], [1], [0, 0, 1, 1], [], []>} : vector<256x64xbf16>, vector<64x128xbf16>, vector<256x128xf32> -> vector<256x128xf32>
    %c0_3 = arith.constant 0 : index
    %c0_4 = arith.constant 0 : index
    %3 = vector.load %arg3[%c0_3, %c0_4] : memref<1x32xf32, #tpu.memory_space<vmem>>, vector<1x32xf32>
    %c0_5 = arith.constant 0 : index
    %c0_6 = arith.constant 0 : index
    %4 = vector.load %arg4[%c0_5, %c0_6] : memref<1x32xf32, #tpu.memory_space<vmem>>, vector<1x32xf32>
    %5 = vector.extract_strided_slice %2 {offsets = [0, 0], sizes = [256, 32], strides = [1, 1]} : vector<256x128xf32> to vector<256x32xf32>
    %cst_7 = arith.constant dense<0.000000e+00> : vector<256xf32>
    %6 = vector.multi_reduction <add>, %5, %cst_7 [1] : vector<256x32xf32> to vector<256xf32>
    %7 = vector.shape_cast %6 : vector<256xf32> to vector<256x1xf32>
    %cst_8 = arith.constant 3.200000e+01 : f32
    %8 = vector.broadcast %cst_8 : f32 to vector<256x1xf32>
    %9 = arith.divf %7, %8 : vector<256x1xf32>
    %10 = vector.broadcast %9 : vector<256x1xf32> to vector<256x32xf32>
    %11 = arith.subf %5, %10 : vector<256x32xf32>
    %12 = arith.mulf %11, %11 : vector<256x32xf32>
    %cst_9 = arith.constant dense<0.000000e+00> : vector<256xf32>
    %13 = vector.multi_reduction <add>, %12, %cst_9 [1] : vector<256x32xf32> to vector<256xf32>
    %14 = vector.shape_cast %13 : vector<256xf32> to vector<256x1xf32>
    %cst_10 = arith.constant 3.200000e+01 : f32
    %15 = vector.broadcast %cst_10 : f32 to vector<256x1xf32>
    %16 = arith.divf %14, %15 : vector<256x1xf32>
    %cst_11 = arith.constant 9.99999974E-6 : f32
    %17 = vector.broadcast %cst_11 : f32 to vector<256x1xf32>
    %18 = arith.addf %16, %17 : vector<256x1xf32>
    %19 = math.rsqrt %18 : vector<256x1xf32>
    %20 = vector.broadcast %19 : vector<256x1xf32> to vector<256x32xf32>
    %21 = arith.mulf %11, %20 : vector<256x32xf32>
    %22 = vector.broadcast %3 : vector<1x32xf32> to vector<256x32xf32>
    %23 = arith.mulf %21, %22 : vector<256x32xf32>
    %24 = vector.broadcast %4 : vector<1x32xf32> to vector<256x32xf32>
    %25 = arith.addf %23, %24 : vector<256x32xf32>
    %26 = vector.extract_strided_slice %2 {offsets = [0, 32], sizes = [256, 32], strides = [1, 1]} : vector<256x128xf32> to vector<256x32xf32>
    %cst_12 = arith.constant dense<0.000000e+00> : vector<256xf32>
    %27 = vector.multi_reduction <add>, %26, %cst_12 [1] : vector<256x32xf32> to vector<256xf32>
    %28 = vector.shape_cast %27 : vector<256xf32> to vector<256x1xf32>
    %cst_13 = arith.constant 3.200000e+01 : f32
    %29 = vector.broadcast %cst_13 : f32 to vector<256x1xf32>
    %30 = arith.divf %28, %29 : vector<256x1xf32>
    %31 = vector.broadcast %30 : vector<256x1xf32> to vector<256x32xf32>
    %32 = arith.subf %26, %31 : vector<256x32xf32>
    %33 = arith.mulf %32, %32 : vector<256x32xf32>
    %cst_14 = arith.constant dense<0.000000e+00> : vector<256xf32>
    %34 = vector.multi_reduction <add>, %33, %cst_14 [1] : vector<256x32xf32> to vector<256xf32>
    %35 = vector.shape_cast %34 : vector<256xf32> to vector<256x1xf32>
    %cst_15 = arith.constant 3.200000e+01 : f32
    %36 = vector.broadcast %cst_15 : f32 to vector<256x1xf32>
    %37 = arith.divf %35, %36 : vector<256x1xf32>
    %cst_16 = arith.constant 9.99999974E-6 : f32
    %38 = vector.broadcast %cst_16 : f32 to vector<256x1xf32>
    %39 = arith.addf %37, %38 : vector<256x1xf32>
    %40 = math.rsqrt %39 : vector<256x1xf32>
    %41 = vector.broadcast %40 : vector<256x1xf32> to vector<256x32xf32>
    %42 = arith.mulf %32, %41 : vector<256x32xf32>
    %43 = vector.broadcast %3 : vector<1x32xf32> to vector<256x32xf32>
    %44 = arith.mulf %42, %43 : vector<256x32xf32>
    %45 = vector.broadcast %4 : vector<1x32xf32> to vector<256x32xf32>
    %46 = arith.addf %44, %45 : vector<256x32xf32>
    %47 = vector.extract_strided_slice %2 {offsets = [0, 64], sizes = [256, 32], strides = [1, 1]} : vector<256x128xf32> to vector<256x32xf32>
    %cst_17 = arith.constant dense<0.000000e+00> : vector<256xf32>
    %48 = vector.multi_reduction <add>, %47, %cst_17 [1] : vector<256x32xf32> to vector<256xf32>
    %49 = vector.shape_cast %48 : vector<256xf32> to vector<256x1xf32>
    %cst_18 = arith.constant 3.200000e+01 : f32
    %50 = vector.broadcast %cst_18 : f32 to vector<256x1xf32>
    %51 = arith.divf %49, %50 : vector<256x1xf32>
    %52 = vector.broadcast %51 : vector<256x1xf32> to vector<256x32xf32>
    %53 = arith.subf %47, %52 : vector<256x32xf32>
    %54 = arith.mulf %53, %53 : vector<256x32xf32>
    %cst_19 = arith.constant dense<0.000000e+00> : vector<256xf32>
    %55 = vector.multi_reduction <add>, %54, %cst_19 [1] : vector<256x32xf32> to vector<256xf32>
    %56 = vector.shape_cast %55 : vector<256xf32> to vector<256x1xf32>
    %cst_20 = arith.constant 3.200000e+01 : f32
    %57 = vector.broadcast %cst_20 : f32 to vector<256x1xf32>
    %58 = arith.divf %56, %57 : vector<256x1xf32>
    %cst_21 = arith.constant 9.99999974E-6 : f32
    %59 = vector.broadcast %cst_21 : f32 to vector<256x1xf32>
    %60 = arith.addf %58, %59 : vector<256x1xf32>
    %61 = math.rsqrt %60 : vector<256x1xf32>
    %62 = vector.broadcast %61 : vector<256x1xf32> to vector<256x32xf32>
    %63 = arith.mulf %53, %62 : vector<256x32xf32>
    %64 = vector.broadcast %3 : vector<1x32xf32> to vector<256x32xf32>
    %65 = arith.mulf %63, %64 : vector<256x32xf32>
    %66 = vector.broadcast %4 : vector<1x32xf32> to vector<256x32xf32>
    %67 = arith.addf %65, %66 : vector<256x32xf32>
    %68 = vector.extract_strided_slice %2 {offsets = [0, 96], sizes = [256, 32], strides = [1, 1]} : vector<256x128xf32> to vector<256x32xf32>
    %cst_22 = arith.constant dense<0.000000e+00> : vector<256xf32>
    %69 = vector.multi_reduction <add>, %68, %cst_22 [1] : vector<256x32xf32> to vector<256xf32>
    %70 = vector.shape_cast %69 : vector<256xf32> to vector<256x1xf32>
    %cst_23 = arith.constant 3.200000e+01 : f32
    %71 = vector.broadcast %cst_23 : f32 to vector<256x1xf32>
    %72 = arith.divf %70, %71 : vector<256x1xf32>
    %73 = vector.broadcast %72 : vector<256x1xf32> to vector<256x32xf32>
    %74 = arith.subf %68, %73 : vector<256x32xf32>
    %75 = arith.mulf %74, %74 : vector<256x32xf32>
    %cst_24 = arith.constant dense<0.000000e+00> : vector<256xf32>
    %76 = vector.multi_reduction <add>, %75, %cst_24 [1] : vector<256x32xf32> to vector<256xf32>
    %77 = vector.shape_cast %76 : vector<256xf32> to vector<256x1xf32>
    %cst_25 = arith.constant 3.200000e+01 : f32
    %78 = vector.broadcast %cst_25 : f32 to vector<256x1xf32>
    %79 = arith.divf %77, %78 : vector<256x1xf32>
    %cst_26 = arith.constant 9.99999974E-6 : f32
    %80 = vector.broadcast %cst_26 : f32 to vector<256x1xf32>
    %81 = arith.addf %79, %80 : vector<256x1xf32>
    %82 = math.rsqrt %81 : vector<256x1xf32>
    %83 = vector.broadcast %82 : vector<256x1xf32> to vector<256x32xf32>
    %84 = arith.mulf %74, %83 : vector<256x32xf32>
    %85 = vector.broadcast %3 : vector<1x32xf32> to vector<256x32xf32>
    %86 = arith.mulf %84, %85 : vector<256x32xf32>
    %87 = vector.broadcast %4 : vector<1x32xf32> to vector<256x32xf32>
    %88 = arith.addf %86, %87 : vector<256x32xf32>
    %89 = tpu.concatenate %25, %46, %67, %88 in 1 : vector<256x32xf32>, vector<256x32xf32>, vector<256x32xf32>, vector<256x32xf32> -> vector<256x128xf32>
    %c0_27 = arith.constant 0 : index
    %c0_28 = arith.constant 0 : index
    %90 = vector.load %arg5[%c0_27, %c0_28] : memref<256x128xf32, #tpu.memory_space<vmem>>, vector<256x128xf32>
    tpu.vector_store %arg5[%c0_27, %c0_28], %89 {strides = array<i32>} : memref<256x128xf32, #tpu.memory_space<vmem>>, vector<256x128xf32>,
    return
  }
  func.func @transform_0(%arg0: i32) -> (i32, i32) {
    %c0_i32 = arith.constant 0 : i32
    %c0_i32_0 = arith.constant 0 : i32
    return %arg0, %c0_i32 : i32, i32
  }
  func.func @transform_1(%arg0: i32) -> (i32, i32) {
    %c0_i32 = arith.constant 0 : i32
    %c0_i32_0 = arith.constant 0 : i32
    %c0_i32_1 = arith.constant 0 : i32
    return %c0_i32, %c0_i32_0 : i32, i32
  }
  func.func @transform_2(%arg0: i32) -> (i32, i32) {
    %c0_i32 = arith.constant 0 : i32
    %c0_i32_0 = arith.constant 0 : i32
    %c0_i32_1 = arith.constant 0 : i32
    return %c0_i32, %c0_i32_0 : i32, i32
  }
  func.func @transform_3(%arg0: i32) -> (i32, i32) {
    %c0_i32 = arith.constant 0 : i32
    %c0_i32_0 = arith.constant 0 : i32
    %c0_i32_1 = arith.constant 0 : i32
    return %c0_i32, %c0_i32_0 : i32, i32
  }
  func.func @transform_4(%arg0: i32) -> (i32, i32) {
    %c0_i32 = arith.constant 0 : i32
    %c0_i32_0 = arith.constant 0 : i32
    return %arg0, %c0_i32 : i32, i32
  }
}

</mosaic_0001>

<llo_original>
// kernel: tpu_custom_call.1
$region0: #{tpu_custom_call.1}
  #allocation0 [shape = 'u32[]', space=smem, size = 0x4, offset = 0x4, fixed_abs, tag = 'smem constant byte address 0x4 - core index']
  #allocation1 [shape = 'u32[144,128]{1,0:T(1,128)}', space=vmem, size = 0x12000, scoped, tag = 'internal scratch']
  %s0 = inlined_call_operand.vmem [shape: bf16[512,64], index: 0, kind: input, shape index: {}]
  %s1 = inlined_call_operand.vmem [shape: bf16[64,128], index: 1, kind: input, shape index: {}]
  %s2 = inlined_call_operand.vmem [shape: f32[1,32], index: 2, kind: input, shape index: {}]
  %s3 = inlined_call_operand.vmem [shape: f32[1,32], index: 3, kind: input, shape index: {}]
  %s4 = inlined_call_operand.hbm [shape: f32[512,128], index: 4, kind: output, shape index: {}]
  %s5 = sld [smem:[#allocation0]]
  $region49: #{tpu_custom_call.1} parent=0
    _
  %s7 = ssub.s32 1, %s5
  %s8 = scalar_select 0, %s7, %s5
  $region1: #{tpu_custom_call.1} parent=0
    #allocation2 [shape = 'u8[262144]{0}', space=vmem, size = 0x40000, scoped, tag = 'output window, operand 0']
    #allocation3 [shape = 's32[2]{0}', space=sflag, size = 0x8, scoped, tag = 'scoped memory for tpu_custom_call.1']
    %9 = vsyncpa [#allocation3], 0
    %s10 = scalar_lea.sflag [#allocation3], 1
    %11 = vsyncpa %s10, 0
    loop: start=0, step=1, limit=4
    $region2: #{tpu_custom_call.1} parent=1 // loop_pre_header
      _
    $region3: #{tpu_custom_call.1} parent=1 // loop_header
      %s13 = sphi 0, %s17
      %p14 = scmp.ge.s32.totalorder %s13, 4
      %s23 = sphi 0, %s25
      %s26 = sphi 0, %s23
      %s27 = sphi 0, %s26
      %s43 = sphi 0, %s27
      %s47 = sphi 0, %s47
      %s49 = sphi 0, %s47
      %s50 = sphi 0, %s49
      %s64 = sphi 0, %s50
      %s68 = sphi 0, %s68
      %s70 = sphi 0, %s68
      %s71 = sphi 0, %s70
      %s85 = sphi 0, %s71
      %s89 = sphi 0, %s89
      %s91 = sphi 0, %s89
      %s92 = sphi 0, %s91
      %s106 = sphi 0, %s92
      %s112 = sphi 0, %s114
      %s115 = sphi 0, %s112
      %s116 = sphi 0, %s115
      %s132 = sphi 0, %s116
    $region4: #{tpu_custom_call.1} parent=1 // loop_header_branch
      %16 = sbr.rel (%p14) target = $region8
    $region5: #{tpu_custom_call.1} parent=1 // loop_body
      %s18 = ssub.s32 %s13, 1
      %s19 = ssub.s32 %s13, 2
      %s20 = sadd.s32 %s13, 1
      %s21 = ssub.s32 %s13, %s20
      %p22 = scmp.eq.s32.totalorder %s21, 0
      %s24 = sadd.s32 %s23, 1
      %s25 = scalar_select %p22, %s23, %s24
      %p28 = pneg %p22
      %p29 = scmp.eq.s32.totalorder %s13, 1
      %p30 = por %p28, %p29
      %p31 = scmp.ne.s32.totalorder %s23, %s26
      %p32 = scmp.eq.s32.totalorder %s13, 0
      %p33 = por %p31, %p32
      %p34 = scmp.ne.s32.totalorder %s23, %s26
      %p35 = scmp.eq.s32.totalorder %s18, 1
      %p36 = por %p34, %p35
      %p37 = scmp.ne.s32.totalorder %s26, %s27
      %p38 = scmp.eq.s32.totalorder %s18, 0
      %p39 = por %p37, %p38
      %p40 = scmp.ne.s32.totalorder %s26, %s27
      %p41 = scmp.eq.s32.totalorder %s19, 1
      %p42 = por %p40, %p41
      %p44 = scmp.ne.s32.totalorder %s27, %s43
      %p45 = scmp.eq.s32.totalorder %s19, 0
      %p46 = por %p44, %p45
      %s48 = sadd.s32 %s47, 1
      %p51 = scmp.eq.s32.totalorder %s13, 1
      %p52 = scmp.ne.s32.totalorder %s47, %s49
      %p53 = scmp.eq.s32.totalorder %s13, 0
      %p54 = por %p52, %p53
      %p55 = scmp.ne.s32.totalorder %s47, %s49
      %p56 = scmp.eq.s32.totalorder %s18, 1
      %p57 = por %p55, %p56
      %p58 = scmp.ne.s32.totalorder %s49, %s50
      %p59 = scmp.eq.s32.totalorder %s18, 0
      %p60 = por %p58, %p59
      %p61 = scmp.ne.s32.totalorder %s49, %s50
      %p62 = scmp.eq.s32.totalorder %s19, 1
      %p63 = por %p61, %p62
      %p65 = scmp.ne.s32.totalorder %s50, %s64
      %p66 = scmp.eq.s32.totalorder %s19, 0
      %p67 = por %p65, %p66
      %s69 = sadd.s32 %s68, 1
      %p72 = scmp.eq.s32.totalorder %s13, 1
      %p73 = scmp.ne.s32.totalorder %s68, %s70
      %p74 = scmp.eq.s32.totalorder %s13, 0
      %p75 = por %p73, %p74
      %p76 = scmp.ne.s32.totalorder %s68, %s70
      %p77 = scmp.eq.s32.totalorder %s18, 1
      %p78 = por %p76, %p77
      %p79 = scmp.ne.s32.totalorder %s70, %s71
      %p80 = scmp.eq.s32.totalorder %s18, 0
      %p81 = por %p79, %p80
      %p82 = scmp.ne.s32.totalorder %s70, %s71
      %p83 = scmp.eq.s32.totalorder %s19, 1
      %p84 = por %p82, %p83
      %p86 = scmp.ne.s32.totalorder %s71, %s85
      %p87 = scmp.eq.s32.totalorder %s19, 0
      %p88 = por %p86, %p87
      %s90 = sadd.s32 %s89, 1
      %p93 = scmp.eq.s32.totalorder %s13, 1
      %p94 = scmp.ne.s32.totalorder %s89, %s91
      %p95 = scmp.eq.s32.totalorder %s13, 0
      %p96 = por %p94, %p95
      %p97 = scmp.ne.s32.totalorder %s89, %s91
      %p98 = scmp.eq.s32.totalorder %s18, 1
      %p99 = por %p97, %p98
      %p100 = scmp.ne.s32.totalorder %s91, %s92
      %p101 = scmp.eq.s32.totalorder %s18, 0
      %p102 = por %p100, %p101
      %p103 = scmp.ne.s32.totalorder %s91, %s92
      %p104 = scmp.eq.s32.totalorder %s19, 1
      %p105 = por %p103, %p104
      %p107 = scmp.ne.s32.totalorder %s92, %s106
      %p108 = scmp.eq.s32.totalorder %s19, 0
      %p109 = por %p107, %p108
      %s110 = ssub.s32 %s13, %s20
      %p111 = scmp.eq.s32.totalorder %s110, 0
      %s113 = sadd.s32 %s112, 1
      %s114 = scalar_select %p111, %s112, %s113
      %p117 = pneg %p111
      %p118 = scmp.eq.s32.totalorder %s13, 1
      %p119 = por %p117, %p118
      %p120 = scmp.ne.s32.totalorder %s112, %s115
      %p121 = scmp.eq.s32.totalorder %s13, 0
      %p122 = por %p120, %p121
      %p123 = scmp.ne.s32.totalorder %s112, %s115
      %p124 = scmp.eq.s32.totalorder %s18, 1
      %p125 = por %p123, %p124
      %p126 = scmp.ne.s32.totalorder %s115, %s116
      %p127 = scmp.eq.s32.totalorder %s18, 0
      %p128 = por %p126, %p127
      %p129 = scmp.ne.s32.totalorder %s115, %s116
      %p130 = scmp.eq.s32.totalorder %s19, 1
      %p131 = por %p129, %p130
      %p133 = scmp.ne.s32.totalorder %s116, %s132
      %p134 = scmp.eq.s32.totalorder %s19, 0
      %p135 = por %p133, %p134
      %p136 = scmp.le.s32.totalorder 1, %s13
      %p137 = scmp.lt.s32.totalorder %s13, 3
      %p138 = pnand %p136, %p137
      %p139 = pneg %p138
      // Predicated region
      $region9: #{tpu_custom_call.1} parent=5 // pred_check
        _
      $region10: #{tpu_custom_call.1} parent=5 // pred_check_branch
        %141 = sbr.rel (%p138) target = $region12
      $region11: #{tpu_custom_call.1} parent=5 // pred_region
        %s142 = ssub.s32 %s13, 1
        // Predicated region
        $region13: #{tpu_custom_call.1} parent=11 // pred_check
          %p143 = pneg %p60
        $region14: #{tpu_custom_call.1} parent=11 // pred_check_branch
          %145 = sbr.rel (%p143) target = $region16
        $region15: #{tpu_custom_call.1} parent=11 // pred_region
          _
        $region16: #{tpu_custom_call.1} parent=11 // pred_fallthru
          _
        // Predicated region
        $region17: #{tpu_custom_call.1} parent=11 // pred_check
          %p146 = pneg %p81
        $region18: #{tpu_custom_call.1} parent=11 // pred_check_branch
          %148 = sbr.rel (%p146) target = $region20
        $region19: #{tpu_custom_call.1} parent=11 // pred_region
          _
        $region20: #{tpu_custom_call.1} parent=11 // pred_fallthru
          _
        // Predicated region
        $region21: #{tpu_custom_call.1} parent=11 // pred_check
          %p149 = pneg %p102
        $region22: #{tpu_custom_call.1} parent=11 // pred_check_branch
          %151 = sbr.rel (%p149) target = $region24
        $region23: #{tpu_custom_call.1} parent=11 // pred_region
          _
        $region24: #{tpu_custom_call.1} parent=11 // pred_fallthru
          _
      $region12: #{tpu_custom_call.1} parent=5 // pred_fallthru
        _
      %p152 = scmp.lt.s32.totalorder %s13, 2
      // Predicated region
      $region25: #{tpu_custom_call.1} parent=5 // pred_check
        %p153 = pneg %p152
      $region26: #{tpu_custom_call.1} parent=5 // pred_check_branch
        %155 = sbr.rel (%p153) target = $region28
      $region27: #{tpu_custom_call.1} parent=5 // pred_region
        // Predicated region
        $region29: #{tpu_custom_call.1} parent=27 // pred_check
          %p156 = pneg %p33
        $region30: #{tpu_custom_call.1} parent=27 // pred_check_branch
          %158 = sbr.rel (%p156) target = $region32
        $region31: #{tpu_custom_call.1} parent=27 // pred_region
          %s159 = smul.u32 32, %s13
          %p160 = scmp.lt.s32.totalorder %s159, 63
          %s161 = scalar_select %p160, %s159, 63
          %s162 = smul.addr %s161, 4
          %s163 = scalar_lea.vmem %s0, %s162
          %s164 = smul.u32 32, %s13
        $region32: #{tpu_custom_call.1} parent=27 // pred_fallthru
          _
      $region28: #{tpu_custom_call.1} parent=5 // pred_fallthru
        _
      %p165 = scmp.le.s32.totalorder 1, %s13
      %p166 = scmp.lt.s32.totalorder %s13, 3
      %p167 = pnand %p165, %p166
      %p168 = pneg %p167
      // Predicated region
      $region33: #{tpu_custom_call.1} parent=5 // pred_check
        _
      $region34: #{tpu_custom_call.1} parent=5 // pred_check_branch
        %170 = sbr.rel (%p167) target = $region36
      $region35: #{tpu_custom_call.1} parent=5 // pred_region
        %s171 = ssub.s32 %s13, 1
        %s172 = smul.u32 32, %s18
        %p173 = scmp.lt.s32.totalorder %s172, 63
        %s174 = scalar_select %p173, %s172, 63
        %s175 = smul.addr %s174, 4
        %s176 = scalar_lea.vmem %s0, %s175
        %p177 = pneg %p39
        %p178 = pneg %p36
        %p179 = pneg %p60
        %p180 = pneg %p57
        %p181 = pneg %p81
        %p182 = pneg %p78
        %p183 = pneg %p102
        %p184 = pneg %p99
        %p185 = pneg %p128
        %p186 = pneg %p125
        %s187 = sand.u32 %s115, 1
        %s188 = scalar_lea.sflag [#allocation3], %s187
        %s189 = sand.u32 %s115, 1
        %s190 = smul.addr %s189, 256
        %s191 = scalar_lea.vmem [#allocation2], %s190
        %s192 = smul.u32 32, %s18
        %p193 = scmp.lt.s32.totalorder %s192, 63
        %s194 = scalar_select %p193, %s192, 63
        %s195 = smul.addr %s194, 4
        %s196 = scalar_lea.vmem %s0, %s195
        %s197 = smul.u32 32, %s18
        %s198 = smul.u32 32, %s18
        %v200 = vld [vmem:[%s196] sm:$0xf]
        %v201 = vld [vmem:[%s196 + $0x4] sm:$0xf]
        %v202 = vld [vmem:[%s196 + $0x8] sm:$0xf]
        %v203 = vld [vmem:[%s196 + $0xc] sm:$0xf]
        %v204 = vld [vmem:[%s196 + $0x10] sm:$0xf]
        %v205 = vld [vmem:[%s196 + $0x14] sm:$0xf]
        %v206 = vld [vmem:[%s196 + $0x18] sm:$0xf]
        %v207 = vld [vmem:[%s196 + $0x1c] sm:$0xf]
        %v208 = vld [vmem:[%s196 + $0x20] sm:$0xf]
        %v209 = vld [vmem:[%s196 + $0x24] sm:$0xf]
        %v210 = vld [vmem:[%s196 + $0x28] sm:$0xf]
        %v211 = vld [vmem:[%s196 + $0x2c] sm:$0xf]
        %v212 = vld [vmem:[%s196 + $0x30] sm:$0xf]
        %v213 = vld [vmem:[%s196 + $0x34] sm:$0xf]
        %v214 = vld [vmem:[%s196 + $0x38] sm:$0xf]
        %v215 = vld [vmem:[%s196 + $0x3c] sm:$0xf]
        %v216 = vld [vmem:[%s196 + $0x40] sm:$0xf]
        %v217 = vld [vmem:[%s196 + $0x44] sm:$0xf]
        %v218 = vld [vmem:[%s196 + $0x48] sm:$0xf]
        %v219 = vld [vmem:[%s196 + $0x4c] sm:$0xf]
        %v220 = vld [vmem:[%s196 + $0x50] sm:$0xf]
        %v221 = vld [vmem:[%s196 + $0x54] sm:$0xf]
        %v222 = vld [vmem:[%s196 + $0x58] sm:$0xf]
        %v223 = vld [vmem:[%s196 + $0x5c] sm:$0xf]
        %v224 = vld [vmem:[%s196 + $0x60] sm:$0xf]
        %v225 = vld [vmem:[%s196 + $0x64] sm:$0xf]
        %v226 = vld [vmem:[%s196 + $0x68] sm:$0xf]
        %v227 = vld [vmem:[%s196 + $0x6c] sm:$0xf]
        %v228 = vld [vmem:[%s196 + $0x70] sm:$0xf]
        %v229 = vld [vmem:[%s196 + $0x74] sm:$0xf]
        %v230 = vld [vmem:[%s196 + $0x78] sm:$0xf]
        %v231 = vld [vmem:[%s196 + $0x7c] sm:$0xf]
        %v232 = vld [vmem:[%s1] sm:$0xf]
        %v233 = vld [vmem:[%s1 + $0x4] sm:$0xf]
        %v234 = vld [vmem:[%s1 + $0x8] sm:$0xf]
        %v235 = vld [vmem:[%s1 + $0xc] sm:$0xf]
        %v236 = vld [vmem:[%s1 + $0x10] sm:$0xf]
        %v237 = vld [vmem:[%s1 + $0x14] sm:$0xf]
        %v238 = vld [vmem:[%s1 + $0x18] sm:$0xf]
        %v239 = vld [vmem:[%s1 + $0x1c] sm:$0xf]
        %v272 = vunpack.c.l.b16 %v200
        %v273 = vunpack.c.l.b16 %v201
        %v274 = vunpack.c.l.b16 %v202
        %v275 = vunpack.c.l.b16 %v203
        %v276 = vunpack.c.l.b16 %v204
        %v277 = vunpack.c.l.b16 %v205
        %v278 = vunpack.c.l.b16 %v206
        %v279 = vunpack.c.l.b16 %v207
        %v280 = vunpack.c.l.b16 %v208
        %v281 = vunpack.c.l.b16 %v209
        %v282 = vunpack.c.l.b16 %v210
        %v283 = vunpack.c.l.b16 %v211
        %v284 = vunpack.c.l.b16 %v212
        %v285 = vunpack.c.l.b16 %v213
        %v286 = vunpack.c.l.b16 %v214
        %v287 = vunpack.c.l.b16 %v215
        %v288 = vunpack.c.l.b16 %v216
        %v289 = vunpack.c.l.b16 %v217
        %v290 = vunpack.c.l.b16 %v218
        %v291 = vunpack.c.l.b16 %v219
        %v292 = vunpack.c.l.b16 %v220
        %v293 = vunpack.c.l.b16 %v221
        %v294 = vunpack.c.l.b16 %v222
        %v295 = vunpack.c.l.b16 %v223
        %v296 = vunpack.c.l.b16 %v224
        %v297 = vunpack.c.l.b16 %v225
        %v298 = vunpack.c.l.b16 %v226
        %v299 = vunpack.c.l.b16 %v227
        %v300 = vunpack.c.l.b16 %v228
        %v301 = vunpack.c.l.b16 %v229
        %v302 = vunpack.c.l.b16 %v230
        %v303 = vunpack.c.l.b16 %v231
        %v304 = vpack.c.b16 %v273, %v272
        %v305 = vpack.c.b16 %v275, %v274
        %v306 = vpack.c.b16 %v277, %v276
        %v307 = vpack.c.b16 %v279, %v278
        %v308 = vpack.c.b16 %v281, %v280
        %v309 = vpack.c.b16 %v283, %v282
        %v310 = vpack.c.b16 %v285, %v284
        %v311 = vpack.c.b16 %v287, %v286
        %v312 = vpack.c.b16 %v289, %v288
        %v313 = vpack.c.b16 %v291, %v290
        %v314 = vpack.c.b16 %v293, %v292
        %v315 = vpack.c.b16 %v295, %v294
        %v316 = vpack.c.b16 %v297, %v296
        %v317 = vpack.c.b16 %v299, %v298
        %v318 = vpack.c.b16 %v301, %v300
        %v319 = vpack.c.b16 %v303, %v302
        %v328 = vunpack.c.l.b16 %v232
        %v329 = vunpack.c.l.b16 %v233
        %v330 = vunpack.c.l.b16 %v234
        %v331 = vunpack.c.l.b16 %v235
        %v332 = vunpack.c.l.b16 %v236
        %v333 = vunpack.c.l.b16 %v237
        %v334 = vunpack.c.l.b16 %v238
        %v335 = vunpack.c.l.b16 %v239
        %v336 = vpack.c.b16 %v329, %v328
        %v337 = vpack.c.b16 %v331, %v330
        %v338 = vpack.c.b16 %v333, %v332
        %v339 = vpack.c.b16 %v335, %v334
        %vm344 = vcmask 523264
        %v346 = vsel %vm344, %v304, 0
        %v349 = vsel %vm344, %v305, 0
        %v352 = vsel %vm344, %v306, 0
        %v355 = vsel %vm344, %v307, 0
        %v358 = vsel %vm344, %v308, 0
        %v361 = vsel %vm344, %v309, 0
        %v364 = vsel %vm344, %v310, 0
        %v367 = vsel %vm344, %v311, 0
        %v370 = vsel %vm344, %v312, 0
        %v373 = vsel %vm344, %v313, 0
        %v376 = vsel %vm344, %v314, 0
        %v379 = vsel %vm344, %v315, 0
        %v382 = vsel %vm344, %v316, 0
        %v385 = vsel %vm344, %v317, 0
        %v388 = vsel %vm344, %v318, 0
        %v391 = vsel %vm344, %v319, 0
        %393 = vmatprep.subr.bf16.mxu0 0
        %394 = vmatpush1.bf16.msra.mxu0 %v336
        %395 = vmatprep.subr.bf16.mxu0 0
        %396 = vmatpush1.bf16.msra.mxu0 %v337
        %397 = vmatprep.subr.bf16.mxu0 0
        %398 = vmatpush1.bf16.msra.mxu0 %v338
        %399 = vmatprep.subr.bf16.mxu0 0
        %400 = vmatpush1.bf16.msra.mxu0 %v339
        %401 = vmatprep.subr.bf16.mxu0 0
        %402 = vmatpush1.bf16.msra.mxu0 0
        %403 = vmatprep.subr.bf16.mxu0 0
        %404 = vmatpush1.bf16.msra.mxu0 0
        %405 = vmatprep.subr.bf16.mxu0 0
        %406 = vmatpush1.bf16.msra.mxu0 0
        %407 = vmatprep.subr.bf16.mxu0 0
        %408 = vmatpush1.bf16.msra.mxu0 0
        %409 = vmatprep.subr.bf16.mxu0 0
        %410 = vmatpush1.bf16.msra.mxu0 0
        %411 = vmatprep.subr.bf16.mxu0 0
        %412 = vmatpush1.bf16.msra.mxu0 0
        %413 = vmatprep.subr.bf16.mxu0 0
        %414 = vmatpush1.bf16.msra.mxu0 0
        %415 = vmatprep.subr.bf16.mxu0 0
        %416 = vmatpush1.bf16.msra.mxu0 0
        %417 = vmatprep.subr.bf16.mxu0 0
        %418 = vmatpush1.bf16.msra.mxu0 0
        %419 = vmatprep.subr.bf16.mxu0 0
        %420 = vmatpush1.bf16.msra.mxu0 0
        %421 = vmatprep.subr.bf16.mxu0 0
        %422 = vmatpush1.bf16.msra.mxu0 0
        %423 = vmatprep.subr.bf16.mxu0 0
        %424 = vmatpush1.bf16.msra.mxu0 0
        %425 = vmatprep.mubr.bf16.mxu0 0
        %426 = vmatmul.mubr.bf16.gmra.mrb[0].mxu0 %v346
        %v427 = vpop.f32.mrb[0].mxu0
        %v428 = vadd.f32 0.0, %v427
        %v429 = vpop.f32.mrb[0].mxu0
        %v430 = vpop.f32.mrb[0].mxu0
        %v431 = vadd.f32 0.0, %v430
        %v432 = vpop.f32.mrb[0].mxu0
        %433 = vmatprep.mubr.bf16.mxu0 0
        %434 = vmatmul.mubr.bf16.gmra.mrb[0].mxu0 %v349
        %v435 = vpop.f32.mrb[0].mxu0
        %v436 = vadd.f32 0.0, %v435
        %v437 = vpop.f32.mrb[0].mxu0
        %v438 = vpop.f32.mrb[0].mxu0
        %v439 = vadd.f32 0.0, %v438
        %v440 = vpop.f32.mrb[0].mxu0
        %441 = vmatprep.mubr.bf16.mxu0 0
        %442 = vmatmul.mubr.bf16.gmra.mrb[0].mxu0 %v352
        %v443 = vpop.f32.mrb[0].mxu0
        %v444 = vadd.f32 0.0, %v443
        %v445 = vpop.f32.mrb[0].mxu0
        %v446 = vpop.f32.mrb[0].mxu0
        %v447 = vadd.f32 0.0, %v446
        %v448 = vpop.f32.mrb[0].mxu0
        %449 = vmatprep.mubr.bf16.mxu0 0
        %450 = vmatmul.mubr.bf16.gmra.mrb[0].mxu0 %v355
        %v451 = vpop.f32.mrb[0].mxu0
        %v452 = vadd.f32 0.0, %v451
        %v453 = vpop.f32.mrb[0].mxu0
        %v454 = vpop.f32.mrb[0].mxu0
        %v455 = vadd.f32 0.0, %v454
        %v456 = vpop.f32.mrb[0].mxu0
        %457 = vmatprep.mubr.bf16.mxu0 0
        %458 = vmatmul.mubr.bf16.gmra.mrb[0].mxu0 %v358
        %v459 = vpop.f32.mrb[0].mxu0
        %v460 = vadd.f32 0.0, %v459
        %v461 = vpop.f32.mrb[0].mxu0
        %v462 = vpop.f32.mrb[0].mxu0
        %v463 = vadd.f32 0.0, %v462
        %v464 = vpop.f32.mrb[0].mxu0
        %465 = vmatprep.mubr.bf16.mxu0 0
        %466 = vmatmul.mubr.bf16.gmra.mrb[0].mxu0 %v361
        %v467 = vpop.f32.mrb[0].mxu0
        %v468 = vadd.f32 0.0, %v467
        %v469 = vpop.f32.mrb[0].mxu0
        %v470 = vpop.f32.mrb[0].mxu0
        %v471 = vadd.f32 0.0, %v470
        %v472 = vpop.f32.mrb[0].mxu0
        %473 = vmatprep.mubr.bf16.mxu0 0
        %474 = vmatmul.mubr.bf16.gmra.mrb[0].mxu0 %v364
        %v475 = vpop.f32.mrb[0].mxu0
        %v476 = vadd.f32 0.0, %v475
        %v477 = vpop.f32.mrb[0].mxu0
        %v478 = vpop.f32.mrb[0].mxu0
        %v479 = vadd.f32 0.0, %v478
        %v480 = vpop.f32.mrb[0].mxu0
        %481 = vmatprep.mubr.bf16.mxu0 0
        %482 = vmatmul.mubr.bf16.gmra.mrb[0].mxu0 %v367
        %v483 = vpop.f32.mrb[0].mxu0
        %v484 = vadd.f32 0.0, %v483
        %v485 = vpop.f32.mrb[0].mxu0
        %v486 = vpop.f32.mrb[0].mxu0
        %v487 = vadd.f32 0.0, %v486
        %v488 = vpop.f32.mrb[0].mxu0
        %489 = vmatprep.mubr.bf16.mxu0 0
        %490 = vmatmul.mubr.bf16.gmra.mrb[0].mxu0 %v370
        %v491 = vpop.f32.mrb[0].mxu0
        %v492 = vadd.f32 0.0, %v491
        %v493 = vpop.f32.mrb[0].mxu0
        %v494 = vpop.f32.mrb[0].mxu0
        %v495 = vadd.f32 0.0, %v494
        %v496 = vpop.f32.mrb[0].mxu0
        %497 = vmatprep.mubr.bf16.mxu0 0
        %498 = vmatmul.mubr.bf16.gmra.mrb[0].mxu0 %v373
        %v499 = vpop.f32.mrb[0].mxu0
        %v500 = vadd.f32 0.0, %v499
        %v501 = vpop.f32.mrb[0].mxu0
        %v502 = vpop.f32.mrb[0].mxu0
        %v503 = vadd.f32 0.0, %v502
        %v504 = vpop.f32.mrb[0].mxu0
        %505 = vmatprep.mubr.bf16.mxu0 0
        %506 = vmatmul.mubr.bf16.gmra.mrb[0].mxu0 %v376
        %v507 = vpop.f32.mrb[0].mxu0
        %v508 = vadd.f32 0.0, %v507
        %v509 = vpop.f32.mrb[0].mxu0
        %v510 = vpop.f32.mrb[0].mxu0
        %v511 = vadd.f32 0.0, %v510
        %v512 = vpop.f32.mrb[0].mxu0
        %513 = vmatprep.mubr.bf16.mxu0 0
        %514 = vmatmul.mubr.bf16.gmra.mrb[0].mxu0 %v379
        %v515 = vpop.f32.mrb[0].mxu0
        %v516 = vadd.f32 0.0, %v515
        %v517 = vpop.f32.mrb[0].mxu0
        %v518 = vpop.f32.mrb[0].mxu0
        %v519 = vadd.f32 0.0, %v518
        %v520 = vpop.f32.mrb[0].mxu0
        %521 = vmatprep.mubr.bf16.mxu0 0
        %522 = vmatmul.mubr.bf16.gmra.mrb[0].mxu0 %v382
        %v523 = vpop.f32.mrb[0].mxu0
        %v524 = vadd.f32 0.0, %v523
        %v525 = vpop.f32.mrb[0].mxu0
        %v526 = vpop.f32.mrb[0].mxu0
        %v527 = vadd.f32 0.0, %v526
        %v528 = vpop.f32.mrb[0].mxu0
        %529 = vmatprep.mubr.bf16.mxu0 0
        %530 = vmatmul.mubr.bf16.gmra.mrb[0].mxu0 %v385
        %v531 = vpop.f32.mrb[0].mxu0
        %v532 = vadd.f32 0.0, %v531
        %v533 = vpop.f32.mrb[0].mxu0
        %v534 = vpop.f32.mrb[0].mxu0
        %v535 = vadd.f32 0.0, %v534
        %v536 = vpop.f32.mrb[0].mxu0
        %537 = vmatprep.mubr.bf16.mxu0 0
        %538 = vmatmul.mubr.bf16.gmra.mrb[0].mxu0 %v388
        %v539 = vpop.f32.mrb[0].mxu0
        %v540 = vadd.f32 0.0, %v539
        %v541 = vpop.f32.mrb[0].mxu0
        %v542 = vpop.f32.mrb[0].mxu0
        %v543 = vadd.f32 0.0, %v542
        %v544 = vpop.f32.mrb[0].mxu0
        %545 = vmatprep.mubr.bf16.mxu0 0
        %546 = vmatmul.mubr.bf16.gmra.mrb[0].mxu0 %v391
        %v547 = vpop.f32.mrb[0].mxu0
        %v548 = vadd.f32 0.0, %v547
        %v549 = vpop.f32.mrb[0].mxu0
        %v550 = vpop.f32.mrb[0].mxu0
        %v551 = vadd.f32 0.0, %v550
        %v552 = vpop.f32.mrb[0].mxu0
        %553 = vdwg.mxu0
        %v554 = vld [vmem:[%s2] sm:$0x1]
        %v555 = vld [vmem:[%s3] sm:$0x1]
        %vm556 = vcmask 261120
        %v557 = vsel %vm556, %v428, 0.0
        %558 = vadd.xlane.f32.xlu0 %v557
        %v559 = vpop.xlane.xlu0 %558
        %v560 = vsel %vm556, %v431, 0.0
        %561 = vadd.xlane.f32.xlu0 %v560
        %v562 = vpop.xlane.xlu0 %561
        %v563 = vsel %vm556, %v436, 0.0
        %564 = vadd.xlane.f32.xlu0 %v563
        %v565 = vpop.xlane.xlu0 %564
        %v566 = vsel %vm556, %v439, 0.0
        %567 = vadd.xlane.f32.xlu0 %v566
        %v568 = vpop.xlane.xlu0 %567
        %v569 = vsel %vm556, %v444, 0.0
        %570 = vadd.xlane.f32.xlu0 %v569
        %v571 = vpop.xlane.xlu0 %570
        %v572 = vsel %vm556, %v447, 0.0
        %573 = vadd.xlane.f32.xlu0 %v572
        %v574 = vpop.xlane.xlu0 %573
        %v575 = vsel %vm556, %v452, 0.0
        %576 = vadd.xlane.f32.xlu0 %v575
        %v577 = vpop.xlane.xlu0 %576
        %v578 = vsel %vm556, %v455, 0.0
        %579 = vadd.xlane.f32.xlu0 %v578
        %v580 = vpop.xlane.xlu0 %579
        %v581 = vsel %vm556, %v460, 0.0
        %582 = vadd.xlane.f32.xlu0 %v581
        %v583 = vpop.xlane.xlu0 %582
        %v584 = vsel %vm556, %v463, 0.0
        %585 = vadd.xlane.f32.xlu0 %v584
        %v586 = vpop.xlane.xlu0 %585
        %v587 = vsel %vm556, %v468, 0.0
        %588 = vadd.xlane.f32.xlu0 %v587
        %v589 = vpop.xlane.xlu0 %588
        %v590 = vsel %vm556, %v471, 0.0
        %591 = vadd.xlane.f32.xlu0 %v590
        %v592 = vpop.xlane.xlu0 %591
        %v593 = vsel %vm556, %v476, 0.0
        %594 = vadd.xlane.f32.xlu0 %v593
        %v595 = vpop.xlane.xlu0 %594
        %v596 = vsel %vm556, %v479, 0.0
        %597 = vadd.xlane.f32.xlu0 %v596
        %v598 = vpop.xlane.xlu0 %597
        %v599 = vsel %vm556, %v484, 0.0
        %600 = vadd.xlane.f32.xlu0 %v599
        %v601 = vpop.xlane.xlu0 %600
        %v602 = vsel %vm556, %v487, 0.0
        %603 = vadd.xlane.f32.xlu0 %v602
        %v604 = vpop.xlane.xlu0 %603
        %v605 = vsel %vm556, %v492, 0.0
        %606 = vadd.xlane.f32.xlu0 %v605
        %v607 = vpop.xlane.xlu0 %606
        %v608 = vsel %vm556, %v495, 0.0
        %609 = vadd.xlane.f32.xlu0 %v608
        %v610 = vpop.xlane.xlu0 %609
        %v611 = vsel %vm556, %v500, 0.0
        %612 = vadd.xlane.f32.xlu0 %v611
        %v613 = vpop.xlane.xlu0 %612
        %v614 = vsel %vm556, %v503, 0.0
        %615 = vadd.xlane.f32.xlu0 %v614
        %v616 = vpop.xlane.xlu0 %615
        %v617 = vsel %vm556, %v508, 0.0
        %618 = vadd.xlane.f32.xlu0 %v617
        %v619 = vpop.xlane.xlu0 %618
        %v620 = vsel %vm556, %v511, 0.0
        %621 = vadd.xlane.f32.xlu0 %v620
        %v622 = vpop.xlane.xlu0 %621
        %v623 = vsel %vm556, %v516, 0.0
        %624 = vadd.xlane.f32.xlu0 %v623
        %v625 = vpop.xlane.xlu0 %624
        %v626 = vsel %vm556, %v519, 0.0
        %627 = vadd.xlane.f32.xlu0 %v626
        %v628 = vpop.xlane.xlu0 %627
        %v629 = vsel %vm556, %v524, 0.0
        %630 = vadd.xlane.f32.xlu0 %v629
        %v631 = vpop.xlane.xlu0 %630
        %v632 = vsel %vm556, %v527, 0.0
        %633 = vadd.xlane.f32.xlu0 %v632
        %v634 = vpop.xlane.xlu0 %633
        %v635 = vsel %vm556, %v532, 0.0
        %636 = vadd.xlane.f32.xlu0 %v635
        %v637 = vpop.xlane.xlu0 %636
        %v638 = vsel %vm556, %v535, 0.0
        %639 = vadd.xlane.f32.xlu0 %v638
        %v640 = vpop.xlane.xlu0 %639
        %v641 = vsel %vm556, %v540, 0.0
        %642 = vadd.xlane.f32.xlu0 %v641
        %v643 = vpop.xlane.xlu0 %642
        %v644 = vsel %vm556, %v543, 0.0
        %645 = vadd.xlane.f32.xlu0 %v644
        %v646 = vpop.xlane.xlu0 %645
        %v647 = vsel %vm556, %v548, 0.0
        %648 = vadd.xlane.f32.xlu0 %v647
        %v649 = vpop.xlane.xlu0 %648
        %v650 = vsel %vm556, %v551, 0.0
        %651 = vadd.xlane.f32.xlu0 %v650
        %v652 = vpop.xlane.xlu0 %651
        %v653 = vrcp.pop 32.0
        %v654 = vmul.f32 %v559, %v653
        %v655 = vmul.f32 %v562, %v653
        %v656 = vmul.f32 %v565, %v653
        %v657 = vmul.f32 %v568, %v653
        %v658 = vmul.f32 %v571, %v653
        %v659 = vmul.f32 %v574, %v653
        %v660 = vmul.f32 %v577, %v653
        %v661 = vmul.f32 %v580, %v653
        %v662 = vmul.f32 %v583, %v653
        %v663 = vmul.f32 %v586, %v653
        %v664 = vmul.f32 %v589, %v653
        %v665 = vmul.f32 %v592, %v653
        %v666 = vmul.f32 %v595, %v653
        %v667 = vmul.f32 %v598, %v653
        %v668 = vmul.f32 %v601, %v653
        %v669 = vmul.f32 %v604, %v653
        %v670 = vmul.f32 %v607, %v653
        %v671 = vmul.f32 %v610, %v653
        %v672 = vmul.f32 %v613, %v653
        %v673 = vmul.f32 %v616, %v653
        %v674 = vmul.f32 %v619, %v653
        %v675 = vmul.f32 %v622, %v653
        %v676 = vmul.f32 %v625, %v653
        %v677 = vmul.f32 %v628, %v653
        %v678 = vmul.f32 %v631, %v653
        %v679 = vmul.f32 %v634, %v653
        %v680 = vmul.f32 %v637, %v653
        %v681 = vmul.f32 %v640, %v653
        %v682 = vmul.f32 %v643, %v653
        %v683 = vmul.f32 %v646, %v653
        %v684 = vmul.f32 %v649, %v653
        %v685 = vmul.f32 %v652, %v653
        %v686 = vsub.f32 %v428, %v654
        %v687 = vsub.f32 %v431, %v655
        %v688 = vsub.f32 %v436, %v656
        %v689 = vsub.f32 %v439, %v657
        %v690 = vsub.f32 %v444, %v658
        %v691 = vsub.f32 %v447, %v659
        %v692 = vsub.f32 %v452, %v660
        %v693 = vsub.f32 %v455, %v661
        %v694 = vsub.f32 %v460, %v662
        %v695 = vsub.f32 %v463, %v663
        %v696 = vsub.f32 %v468, %v664
        %v697 = vsub.f32 %v471, %v665
        %v698 = vsub.f32 %v476, %v666
        %v699 = vsub.f32 %v479, %v667
        %v700 = vsub.f32 %v484, %v668
        %v701 = vsub.f32 %v487, %v669
        %v702 = vsub.f32 %v492, %v670
        %v703 = vsub.f32 %v495, %v671
        %v704 = vsub.f32 %v500, %v672
        %v705 = vsub.f32 %v503, %v673
        %v706 = vsub.f32 %v508, %v674
        %v707 = vsub.f32 %v511, %v675
        %v708 = vsub.f32 %v516, %v676
        %v709 = vsub.f32 %v519, %v677
        %v710 = vsub.f32 %v524, %v678
        %v711 = vsub.f32 %v527, %v679
        %v712 = vsub.f32 %v532, %v680
        %v713 = vsub.f32 %v535, %v681
        %v714 = vsub.f32 %v540, %v682
        %v715 = vsub.f32 %v543, %v683
        %v716 = vsub.f32 %v548, %v684
        %v717 = vsub.f32 %v551, %v685
        %v718 = vmul.f32 %v686, %v686
        %v719 = vmul.f32 %v687, %v687
        %v720 = vmul.f32 %v688, %v688
        %v721 = vmul.f32 %v689, %v689
        %v722 = vmul.f32 %v690, %v690
        %v723 = vmul.f32 %v691, %v691
        %v724 = vmul.f32 %v692, %v692
        %v725 = vmul.f32 %v693, %v693
        %v726 = vmul.f32 %v694, %v694
        %v727 = vmul.f32 %v695, %v695
        %v728 = vmul.f32 %v696, %v696
        %v729 = vmul.f32 %v697, %v697
        %v730 = vmul.f32 %v698, %v698
        %v731 = vmul.f32 %v699, %v699
        %v732 = vmul.f32 %v700, %v700
        %v733 = vmul.f32 %v701, %v701
        %v734 = vmul.f32 %v702, %v702
        %v735 = vmul.f32 %v703, %v703
        %v736 = vmul.f32 %v704, %v704
        %v737 = vmul.f32 %v705, %v705
        %v738 = vmul.f32 %v706, %v706
        %v739 = vmul.f32 %v707, %v707
        %v740 = vmul.f32 %v708, %v708
        %v741 = vmul.f32 %v709, %v709
        %v742 = vmul.f32 %v710, %v710
        %v743 = vmul.f32 %v711, %v711
        %v744 = vmul.f32 %v712, %v712
        %v745 = vmul.f32 %v713, %v713
        %v746 = vmul.f32 %v714, %v714
        %v747 = vmul.f32 %v715, %v715
        %v748 = vmul.f32 %v716, %v716
        %v749 = vmul.f32 %v717, %v717
        %v750 = vsel %vm556, %v718, 0.0
        %751 = vadd.xlane.f32.xlu0 %v750
        %v752 = vpop.xlane.xlu0 %751
        %v753 = vsel %vm556, %v719, 0.0
        %754 = vadd.xlane.f32.xlu0 %v753
        %v755 = vpop.xlane.xlu0 %754
        %v756 = vsel %vm556, %v720, 0.0
        %757 = vadd.xlane.f32.xlu0 %v756
        %v758 = vpop.xlane.xlu0 %757
        %v759 = vsel %vm556, %v721, 0.0
        %760 = vadd.xlane.f32.xlu0 %v759
        %v761 = vpop.xlane.xlu0 %760
        %v762 = vsel %vm556, %v722, 0.0
        %763 = vadd.xlane.f32.xlu0 %v762
        %v764 = vpop.xlane.xlu0 %763
        %v765 = vsel %vm556, %v723, 0.0
        %766 = vadd.xlane.f32.xlu0 %v765
        %v767 = vpop.xlane.xlu0 %766
        %v768 = vsel %vm556, %v724, 0.0
        %769 = vadd.xlane.f32.xlu0 %v768
        %v770 = vpop.xlane.xlu0 %769
        %v771 = vsel %vm556, %v725, 0.0
        %772 = vadd.xlane.f32.xlu0 %v771
        %v773 = vpop.xlane.xlu0 %772
        %v774 = vsel %vm556, %v726, 0.0
        %775 = vadd.xlane.f32.xlu0 %v774
        %v776 = vpop.xlane.xlu0 %775
        %v777 = vsel %vm556, %v727, 0.0
        %778 = vadd.xlane.f32.xlu0 %v777
        %v779 = vpop.xlane.xlu0 %778
        %v780 = vsel %vm556, %v728, 0.0
        %781 = vadd.xlane.f32.xlu0 %v780
        %v782 = vpop.xlane.xlu0 %781
        %v783 = vsel %vm556, %v729, 0.0
        %784 = vadd.xlane.f32.xlu0 %v783
        %v785 = vpop.xlane.xlu0 %784
        %v786 = vsel %vm556, %v730, 0.0
        %787 = vadd.xlane.f32.xlu0 %v786
        %v788 = vpop.xlane.xlu0 %787
        %v789 = vsel %vm556, %v731, 0.0
        %790 = vadd.xlane.f32.xlu0 %v789
        %v791 = vpop.xlane.xlu0 %790
        %v792 = vsel %vm556, %v732, 0.0
        %793 = vadd.xlane.f32.xlu0 %v792
        %v794 = vpop.xlane.xlu0 %793
        %v795 = vsel %vm556, %v733, 0.0
        %796 = vadd.xlane.f32.xlu0 %v795
        %v797 = vpop.xlane.xlu0 %796
        %v798 = vsel %vm556, %v734, 0.0
        %799 = vadd.xlane.f32.xlu0 %v798
        %v800 = vpop.xlane.xlu0 %799
        %v801 = vsel %vm556, %v735, 0.0
        %802 = vadd.xlane.f32.xlu0 %v801
        %v803 = vpop.xlane.xlu0 %802
        %v804 = vsel %vm556, %v736, 0.0
        %805 = vadd.xlane.f32.xlu0 %v804
        %v806 = vpop.xlane.xlu0 %805
        %v807 = vsel %vm556, %v737, 0.0
        %808 = vadd.xlane.f32.xlu0 %v807
        %v809 = vpop.xlane.xlu0 %808
        %v810 = vsel %vm556, %v738, 0.0
        %811 = vadd.xlane.f32.xlu0 %v810
        %v812 = vpop.xlane.xlu0 %811
        %v813 = vsel %vm556, %v739, 0.0
        %814 = vadd.xlane.f32.xlu0 %v813
        %v815 = vpop.xlane.xlu0 %814
        %v816 = vsel %vm556, %v740, 0.0
        %817 = vadd.xlane.f32.xlu0 %v816
        %v818 = vpop.xlane.xlu0 %817
        %v819 = vsel %vm556, %v741, 0.0
        %820 = vadd.xlane.f32.xlu0 %v819
        %v821 = vpop.xlane.xlu0 %820
        %v822 = vsel %vm556, %v742, 0.0
        %823 = vadd.xlane.f32.xlu0 %v822
        %v824 = vpop.xlane.xlu0 %823
        %v825 = vsel %vm556, %v743, 0.0
        %826 = vadd.xlane.f32.xlu0 %v825
        %v827 = vpop.xlane.xlu0 %826
        %v828 = vsel %vm556, %v744, 0.0
        %829 = vadd.xlane.f32.xlu0 %v828
        %v830 = vpop.xlane.xlu0 %829
        %v831 = vsel %vm556, %v745, 0.0
        %832 = vadd.xlane.f32.xlu0 %v831
        %v833 = vpop.xlane.xlu0 %832
        %v834 = vsel %vm556, %v746, 0.0
        %835 = vadd.xlane.f32.xlu0 %v834
        %v836 = vpop.xlane.xlu0 %835
        %v837 = vsel %vm556, %v747, 0.0
        %838 = vadd.xlane.f32.xlu0 %v837
        %v839 = vpop.xlane.xlu0 %838
        %v840 = vsel %vm556, %v748, 0.0
        %841 = vadd.xlane.f32.xlu0 %v840
        %v842 = vpop.xlane.xlu0 %841
        %v843 = vsel %vm556, %v749, 0.0
        %844 = vadd.xlane.f32.xlu0 %v843
        %v845 = vpop.xlane.xlu0 %844
        %v846 = vmul.f32 %v752, %v653
        %v847 = vmul.f32 %v755, %v653
        %v848 = vmul.f32 %v758, %v653
        %v849 = vmul.f32 %v761, %v653
        %v850 = vmul.f32 %v764, %v653
        %v851 = vmul.f32 %v767, %v653
        %v852 = vmul.f32 %v770, %v653
        %v853 = vmul.f32 %v773, %v653
        %v854 = vmul.f32 %v776, %v653
        %v855 = vmul.f32 %v779, %v653
        %v856 = vmul.f32 %v782, %v653
        %v857 = vmul.f32 %v785, %v653
        %v858 = vmul.f32 %v788, %v653
        %v859 = vmul.f32 %v791, %v653
        %v860 = vmul.f32 %v794, %v653
        %v861 = vmul.f32 %v797, %v653
        %v862 = vmul.f32 %v800, %v653
        %v863 = vmul.f32 %v803, %v653
        %v864 = vmul.f32 %v806, %v653
        %v865 = vmul.f32 %v809, %v653
        %v866 = vmul.f32 %v812, %v653
        %v867 = vmul.f32 %v815, %v653
        %v868 = vmul.f32 %v818, %v653
        %v869 = vmul.f32 %v821, %v653
        %v870 = vmul.f32 %v824, %v653
        %v871 = vmul.f32 %v827, %v653
        %v872 = vmul.f32 %v830, %v653
        %v873 = vmul.f32 %v833, %v653
        %v874 = vmul.f32 %v836, %v653
        %v875 = vmul.f32 %v839, %v653
        %v876 = vmul.f32 %v842, %v653
        %v877 = vmul.f32 %v845, %v653
        %v878 = vadd.f32 %v846, 1e-05
        %v879 = vadd.f32 %v847, 1e-05
        %v880 = vadd.f32 %v848, 1e-05
        %v881 = vadd.f32 %v849, 1e-05
        %v882 = vadd.f32 %v850, 1e-05
        %v883 = vadd.f32 %v851, 1e-05
        %v884 = vadd.f32 %v852, 1e-05
        %v885 = vadd.f32 %v853, 1e-05
        %v886 = vadd.f32 %v854, 1e-05
        %v887 = vadd.f32 %v855, 1e-05
        %v888 = vadd.f32 %v856, 1e-05
        %v889 = vadd.f32 %v857, 1e-05
        %v890 = vadd.f32 %v858, 1e-05
        %v891 = vadd.f32 %v859, 1e-05
        %v892 = vadd.f32 %v860, 1e-05
        %v893 = vadd.f32 %v861, 1e-05
        %v894 = vadd.f32 %v862, 1e-05
        %v895 = vadd.f32 %v863, 1e-05
        %v896 = vadd.f32 %v864, 1e-05
        %v897 = vadd.f32 %v865, 1e-05
        %v898 = vadd.f32 %v866, 1e-05
        %v899 = vadd.f32 %v867, 1e-05
        %v900 = vadd.f32 %v868, 1e-05
        %v901 = vadd.f32 %v869, 1e-05
        %v902 = vadd.f32 %v870, 1e-05
        %v903 = vadd.f32 %v871, 1e-05
        %v904 = vadd.f32 %v872, 1e-05
        %v905 = vadd.f32 %v873, 1e-05
        %v906 = vadd.f32 %v874, 1e-05
        %v907 = vadd.f32 %v875, 1e-05
        %v908 = vadd.f32 %v876, 1e-05
        %v909 = vadd.f32 %v877, 1e-05
        %v910 = vrsqrt.pop %v878
        %v911 = vrsqrt.pop %v879
        %v912 = vrsqrt.pop %v880
        %v913 = vrsqrt.pop %v881
        %v914 = vrsqrt.pop %v882
        %v915 = vrsqrt.pop %v883
        %v916 = vrsqrt.pop %v884
        %v917 = vrsqrt.pop %v885
        %v918 = vrsqrt.pop %v886
        %v919 = vrsqrt.pop %v887
        %v920 = vrsqrt.pop %v888
        %v921 = vrsqrt.pop %v889
        %v922 = vrsqrt.pop %v890
        %v923 = vrsqrt.pop %v891
        %v924 = vrsqrt.pop %v892
        %v925 = vrsqrt.pop %v893
        %v926 = vrsqrt.pop %v894
        %v927 = vrsqrt.pop %v895
        %v928 = vrsqrt.pop %v896
        %v929 = vrsqrt.pop %v897
        %v930 = vrsqrt.pop %v898
        %v931 = vrsqrt.pop %v899
        %v932 = vrsqrt.pop %v900
        %v933 = vrsqrt.pop %v901
        %v934 = vrsqrt.pop %v902
        %v935 = vrsqrt.pop %v903
        %v936 = vrsqrt.pop %v904
        %v937 = vrsqrt.pop %v905
        %v938 = vrsqrt.pop %v906
        %v939 = vrsqrt.pop %v907
        %v940 = vrsqrt.pop %v908
        %v941 = vrsqrt.pop %v909
        %v942 = vmul.f32 %v686, %v910
        %v943 = vmul.f32 %v687, %v911
        %v944 = vmul.f32 %v688, %v912
        %v945 = vmul.f32 %v689, %v913
        %v946 = vmul.f32 %v690, %v914
        %v947 = vmul.f32 %v691, %v915
        %v948 = vmul.f32 %v692, %v916
        %v949 = vmul.f32 %v693, %v917
        %v950 = vmul.f32 %v694, %v918
        %v951 = vmul.f32 %v695, %v919
        %v952 = vmul.f32 %v696, %v920
        %v953 = vmul.f32 %v697, %v921
        %v954 = vmul.f32 %v698, %v922
        %v955 = vmul.f32 %v699, %v923
        %v956 = vmul.f32 %v700, %v924
        %v957 = vmul.f32 %v701, %v925
        %v958 = vmul.f32 %v702, %v926
        %v959 = vmul.f32 %v703, %v927
        %v960 = vmul.f32 %v704, %v928
        %v961 = vmul.f32 %v705, %v929
        %v962 = vmul.f32 %v706, %v930
        %v963 = vmul.f32 %v707, %v931
        %v964 = vmul.f32 %v708, %v932
        %v965 = vmul.f32 %v709, %v933
        %v966 = vmul.f32 %v710, %v934
        %v967 = vmul.f32 %v711, %v935
        %v968 = vmul.f32 %v712, %v936
        %v969 = vmul.f32 %v713, %v937
        %v970 = vmul.f32 %v714, %v938
        %v971 = vmul.f32 %v715, %v939
        %v972 = vmul.f32 %v716, %v940
        %v973 = vmul.f32 %v717, %v941
        %v975 = vlaneseq
        %v976 = vshrl.u32 %v975, 7
        %v977 = vsub.s32 0, %v976
        %v978 = vrot.slane %v554, %v977
        %v980 = vmul.f32 %v942, %v978
        %v981 = vmul.f32 %v943, %v978
        %v982 = vmul.f32 %v944, %v978
        %v983 = vmul.f32 %v945, %v978
        %v984 = vmul.f32 %v946, %v978
        %v985 = vmul.f32 %v947, %v978
        %v986 = vmul.f32 %v948, %v978
        %v987 = vmul.f32 %v949, %v978
        %v988 = vmul.f32 %v950, %v978
        %v989 = vmul.f32 %v951, %v978
        %v990 = vmul.f32 %v952, %v978
        %v991 = vmul.f32 %v953, %v978
        %v992 = vmul.f32 %v954, %v978
        %v993 = vmul.f32 %v955, %v978
        %v994 = vmul.f32 %v956, %v978
        %v995 = vmul.f32 %v957, %v978
        %v996 = vmul.f32 %v958, %v978
        %v997 = vmul.f32 %v959, %v978
        %v998 = vmul.f32 %v960, %v978
        %v999 = vmul.f32 %v961, %v978
        %v1000 = vmul.f32 %v962, %v978
        %v1001 = vmul.f32 %v963, %v978
        %v1002 = vmul.f32 %v964, %v978
        %v1003 = vmul.f32 %v965, %v978
        %v1004 = vmul.f32 %v966, %v978
        %v1005 = vmul.f32 %v967, %v978
        %v1006 = vmul.f32 %v968, %v978
        %v1007 = vmul.f32 %v969, %v978
        %v1008 = vmul.f32 %v970, %v978
        %v1009 = vmul.f32 %v971, %v978
        %v1010 = vmul.f32 %v972, %v978
        %v1011 = vmul.f32 %v973, %v978
        %v1013 = vlaneseq
        %v1014 = vshrl.u32 %v1013, 7
        %v1015 = vsub.s32 0, %v1014
        %v1016 = vrot.slane %v555, %v1015
        %v1018 = vadd.f32 %v980, %v1016
        %v1019 = vadd.f32 %v981, %v1016
        %v1020 = vadd.f32 %v982, %v1016
        %v1021 = vadd.f32 %v983, %v1016
        %v1022 = vadd.f32 %v984, %v1016
        %v1023 = vadd.f32 %v985, %v1016
        %v1024 = vadd.f32 %v986, %v1016
        %v1025 = vadd.f32 %v987, %v1016
        %v1026 = vadd.f32 %v988, %v1016
        %v1027 = vadd.f32 %v989, %v1016
        %v1028 = vadd.f32 %v990, %v1016
        %v1029 = vadd.f32 %v991, %v1016
        %v1030 = vadd.f32 %v992, %v1016
        %v1031 = vadd.f32 %v993, %v1016
        %v1032 = vadd.f32 %v994, %v1016
        %v1033 = vadd.f32 %v995, %v1016
        %v1034 = vadd.f32 %v996, %v1016
        %v1035 = vadd.f32 %v997, %v1016
        %v1036 = vadd.f32 %v998, %v1016
        %v1037 = vadd.f32 %v999, %v1016
        %v1038 = vadd.f32 %v1000, %v1016
        %v1039 = vadd.f32 %v1001, %v1016
        %v1040 = vadd.f32 %v1002, %v1016
        %v1041 = vadd.f32 %v1003, %v1016
        %v1042 = vadd.f32 %v1004, %v1016
        %v1043 = vadd.f32 %v1005, %v1016
        %v1044 = vadd.f32 %v1006, %v1016
        %v1045 = vadd.f32 %v1007, %v1016
        %v1046 = vadd.f32 %v1008, %v1016
        %v1047 = vadd.f32 %v1009, %v1016
        %v1048 = vadd.f32 %v1010, %v1016
        %v1049 = vadd.f32 %v1011, %v1016
        %1082 = vrot.lane.b32.xlu0 %v428, 96
        %v1083 = vpop.permute.xlu0 %1082
        %1084 = vrot.lane.b32.xlu0 %v431, 96
        %v1085 = vpop.permute.xlu0 %1084
        %1086 = vrot.lane.b32.xlu0 %v436, 96
        %v1087 = vpop.permute.xlu0 %1086
        %1088 = vrot.lane.b32.xlu0 %v439, 96
        %v1089 = vpop.permute.xlu0 %1088
        %1090 = vrot.lane.b32.xlu0 %v444, 96
        %v1091 = vpop.permute.xlu0 %1090
        %1092 = vrot.lane.b32.xlu0 %v447, 96
        %v1093 = vpop.permute.xlu0 %1092
        %1094 = vrot.lane.b32.xlu0 %v452, 96
        %v1095 = vpop.permute.xlu0 %1094
        %1096 = vrot.lane.b32.xlu0 %v455, 96
        %v1097 = vpop.permute.xlu0 %1096
        %1098 = vrot.lane.b32.xlu0 %v460, 96
        %v1099 = vpop.permute.xlu0 %1098
        %1100 = vrot.lane.b32.xlu0 %v463, 96
        %v1101 = vpop.permute.xlu0 %1100
        %1102 = vrot.lane.b32.xlu0 %v468, 96
        %v1103 = vpop.permute.xlu0 %1102
        %1104 = vrot.lane.b32.xlu0 %v471, 96
        %v1105 = vpop.permute.xlu0 %1104
        %1106 = vrot.lane.b32.xlu0 %v476, 96
        %v1107 = vpop.permute.xlu0 %1106
        %1108 = vrot.lane.b32.xlu0 %v479, 96
        %v1109 = vpop.permute.xlu0 %1108
        %1110 = vrot.lane.b32.xlu0 %v484, 96
        %v1111 = vpop.permute.xlu0 %1110
        %1112 = vrot.lane.b32.xlu0 %v487, 96
        %v1113 = vpop.permute.xlu0 %1112
        %1114 = vrot.lane.b32.xlu0 %v492, 96
        %v1115 = vpop.permute.xlu0 %1114
        %1116 = vrot.lane.b32.xlu0 %v495, 96
        %v1117 = vpop.permute.xlu0 %1116
        %1118 = vrot.lane.b32.xlu0 %v500, 96
        %v1119 = vpop.permute.xlu0 %1118
        %1120 = vrot.lane.b32.xlu0 %v503, 96
        %v1121 = vpop.permute.xlu0 %1120
        %1122 = vrot.lane.b32.xlu0 %v508, 96
        %v1123 = vpop.permute.xlu0 %1122
        %1124 = vrot.lane.b32.xlu0 %v511, 96
        %v1125 = vpop.permute.xlu0 %1124
        %1126 = vrot.lane.b32.xlu0 %v516, 96
        %v1127 = vpop.permute.xlu0 %1126
        %1128 = vrot.lane.b32.xlu0 %v519, 96
        %v1129 = vpop.permute.xlu0 %1128
        %1130 = vrot.lane.b32.xlu0 %v524, 96
        %v1131 = vpop.permute.xlu0 %1130
        %1132 = vrot.lane.b32.xlu0 %v527, 96
        %v1133 = vpop.permute.xlu0 %1132
        %1134 = vrot.lane.b32.xlu0 %v532, 96
        %v1135 = vpop.permute.xlu0 %1134
        %1136 = vrot.lane.b32.xlu0 %v535, 96
        %v1137 = vpop.permute.xlu0 %1136
        %1138 = vrot.lane.b32.xlu0 %v540, 96
        %v1139 = vpop.permute.xlu0 %1138
        %1140 = vrot.lane.b32.xlu0 %v543, 96
        %v1141 = vpop.permute.xlu0 %1140
        %1142 = vrot.lane.b32.xlu0 %v548, 96
        %v1143 = vpop.permute.xlu0 %1142
        %1144 = vrot.lane.b32.xlu0 %v551, 96
        %v1145 = vpop.permute.xlu0 %1144
        %v1178 = vsel %vm556, %v1083, 0.0
        %1179 = vadd.xlane.f32.xlu0 %v1178
        %v1180 = vpop.xlane.xlu0 %1179
        %v1181 = vsel %vm556, %v1085, 0.0
        %1182 = vadd.xlane.f32.xlu0 %v1181
        %v1183 = vpop.xlane.xlu0 %1182
        %v1184 = vsel %vm556, %v1087, 0.0
        %1185 = vadd.xlane.f32.xlu0 %v1184
        %v1186 = vpop.xlane.xlu0 %1185
        %v1187 = vsel %vm556, %v1089, 0.0
        %1188 = vadd.xlane.f32.xlu0 %v1187
        %v1189 = vpop.xlane.xlu0 %1188
        %v1190 = vsel %vm556, %v1091, 0.0
        %1191 = vadd.xlane.f32.xlu0 %v1190
        %v1192 = vpop.xlane.xlu0 %1191
        %v1193 = vsel %vm556, %v1093, 0.0
        %1194 = vadd.xlane.f32.xlu0 %v1193
        %v1195 = vpop.xlane.xlu0 %1194
        %v1196 = vsel %vm556, %v1095, 0.0
        %1197 = vadd.xlane.f32.xlu0 %v1196
        %v1198 = vpop.xlane.xlu0 %1197
        %v1199 = vsel %vm556, %v1097, 0.0
        %1200 = vadd.xlane.f32.xlu0 %v1199
        %v1201 = vpop.xlane.xlu0 %1200
        %v1202 = vsel %vm556, %v1099, 0.0
        %1203 = vadd.xlane.f32.xlu0 %v1202
        %v1204 = vpop.xlane.xlu0 %1203
        %v1205 = vsel %vm556, %v1101, 0.0
        %1206 = vadd.xlane.f32.xlu0 %v1205
        %v1207 = vpop.xlane.xlu0 %1206
        %v1208 = vsel %vm556, %v1103, 0.0
        %1209 = vadd.xlane.f32.xlu0 %v1208
        %v1210 = vpop.xlane.xlu0 %1209
        %v1211 = vsel %vm556, %v1105, 0.0
        %1212 = vadd.xlane.f32.xlu0 %v1211
        %v1213 = vpop.xlane.xlu0 %1212
        %v1214 = vsel %vm556, %v1107, 0.0
        %1215 = vadd.xlane.f32.xlu0 %v1214
        %v1216 = vpop.xlane.xlu0 %1215
        %v1217 = vsel %vm556, %v1109, 0.0
        %1218 = vadd.xlane.f32.xlu0 %v1217
        %v1219 = vpop.xlane.xlu0 %1218
        %v1220 = vsel %vm556, %v1111, 0.0
        %1221 = vadd.xlane.f32.xlu0 %v1220
        %v1222 = vpop.xlane.xlu0 %1221
        %v1223 = vsel %vm556, %v1113, 0.0
        %1224 = vadd.xlane.f32.xlu0 %v1223
        %v1225 = vpop.xlane.xlu0 %1224
        %v1226 = vsel %vm556, %v1115, 0.0
        %1227 = vadd.xlane.f32.xlu0 %v1226
        %v1228 = vpop.xlane.xlu0 %1227
        %v1229 = vsel %vm556, %v1117, 0.0
        %1230 = vadd.xlane.f32.xlu0 %v1229
        %v1231 = vpop.xlane.xlu0 %1230
        %v1232 = vsel %vm556, %v1119, 0.0
        %1233 = vadd.xlane.f32.xlu0 %v1232
        %v1234 = vpop.xlane.xlu0 %1233
        %v1235 = vsel %vm556, %v1121, 0.0
        %1236 = vadd.xlane.f32.xlu0 %v1235
        %v1237 = vpop.xlane.xlu0 %1236
        %v1238 = vsel %vm556, %v1123, 0.0
        %1239 = vadd.xlane.f32.xlu0 %v1238
        %v1240 = vpop.xlane.xlu0 %1239
        %v1241 = vsel %vm556, %v1125, 0.0
        %1242 = vadd.xlane.f32.xlu0 %v1241
        %v1243 = vpop.xlane.xlu0 %1242
        %v1244 = vsel %vm556, %v1127, 0.0
        %1245 = vadd.xlane.f32.xlu0 %v1244
        %v1246 = vpop.xlane.xlu0 %1245
        %v1247 = vsel %vm556, %v1129, 0.0
        %1248 = vadd.xlane.f32.xlu0 %v1247
        %v1249 = vpop.xlane.xlu0 %1248
        %v1250 = vsel %vm556, %v1131, 0.0
        %1251 = vadd.xlane.f32.xlu0 %v1250
        %v1252 = vpop.xlane.xlu0 %1251
        %v1253 = vsel %vm556, %v1133, 0.0
        %1254 = vadd.xlane.f32.xlu0 %v1253
        %v1255 = vpop.xlane.xlu0 %1254
        %v1256 = vsel %vm556, %v1135, 0.0
        %1257 = vadd.xlane.f32.xlu0 %v1256
        %v1258 = vpop.xlane.xlu0 %1257
        %v1259 = vsel %vm556, %v1137, 0.0
        %1260 = vadd.xlane.f32.xlu0 %v1259
        %v1261 = vpop.xlane.xlu0 %1260
        %v1262 = vsel %vm556, %v1139, 0.0
        %1263 = vadd.xlane.f32.xlu0 %v1262
        %v1264 = vpop.xlane.xlu0 %1263
        %v1265 = vsel %vm556, %v1141, 0.0
        %1266 = vadd.xlane.f32.xlu0 %v1265
        %v1267 = vpop.xlane.xlu0 %1266
        %v1268 = vsel %vm556, %v1143, 0.0
        %1269 = vadd.xlane.f32.xlu0 %v1268
        %v1270 = vpop.xlane.xlu0 %1269
        %v1271 = vsel %vm556, %v1145, 0.0
        %1272 = vadd.xlane.f32.xlu0 %v1271
        %v1273 = vpop.xlane.xlu0 %1272
        %v1274 = vmul.f32 %v1180, %v653
        %v1275 = vmul.f32 %v1183, %v653
        %v1276 = vmul.f32 %v1186, %v653
        %v1277 = vmul.f32 %v1189, %v653
        %v1278 = vmul.f32 %v1192, %v653
        %v1279 = vmul.f32 %v1195, %v653
        %v1280 = vmul.f32 %v1198, %v653
        %v1281 = vmul.f32 %v1201, %v653
        %v1282 = vmul.f32 %v1204, %v653
        %v1283 = vmul.f32 %v1207, %v653
        %v1284 = vmul.f32 %v1210, %v653
        %v1285 = vmul.f32 %v1213, %v653
        %v1286 = vmul.f32 %v1216, %v653
        %v1287 = vmul.f32 %v1219, %v653
        %v1288 = vmul.f32 %v1222, %v653
        %v1289 = vmul.f32 %v1225, %v653
        %v1290 = vmul.f32 %v1228, %v653
        %v1291 = vmul.f32 %v1231, %v653
        %v1292 = vmul.f32 %v1234, %v653
        %v1293 = vmul.f32 %v1237, %v653
        %v1294 = vmul.f32 %v1240, %v653
        %v1295 = vmul.f32 %v1243, %v653
        %v1296 = vmul.f32 %v1246, %v653
        %v1297 = vmul.f32 %v1249, %v653
        %v1298 = vmul.f32 %v1252, %v653
        %v1299 = vmul.f32 %v1255, %v653
        %v1300 = vmul.f32 %v1258, %v653
        %v1301 = vmul.f32 %v1261, %v653
        %v1302 = vmul.f32 %v1264, %v653
        %v1303 = vmul.f32 %v1267, %v653
        %v1304 = vmul.f32 %v1270, %v653
        %v1305 = vmul.f32 %v1273, %v653
        %v1306 = vsub.f32 %v428, %v1274
        %v1307 = vsub.f32 %v431, %v1275
        %v1308 = vsub.f32 %v436, %v1276
        %v1309 = vsub.f32 %v439, %v1277
        %v1310 = vsub.f32 %v444, %v1278
        %v1311 = vsub.f32 %v447, %v1279
        %v1312 = vsub.f32 %v452, %v1280
        %v1313 = vsub.f32 %v455, %v1281
        %v1314 = vsub.f32 %v460, %v1282
        %v1315 = vsub.f32 %v463, %v1283
        %v1316 = vsub.f32 %v468, %v1284
        %v1317 = vsub.f32 %v471, %v1285
        %v1318 = vsub.f32 %v476, %v1286
        %v1319 = vsub.f32 %v479, %v1287
        %v1320 = vsub.f32 %v484, %v1288
        %v1321 = vsub.f32 %v487, %v1289
        %v1322 = vsub.f32 %v492, %v1290
        %v1323 = vsub.f32 %v495, %v1291
        %v1324 = vsub.f32 %v500, %v1292
        %v1325 = vsub.f32 %v503, %v1293
        %v1326 = vsub.f32 %v508, %v1294
        %v1327 = vsub.f32 %v511, %v1295
        %v1328 = vsub.f32 %v516, %v1296
        %v1329 = vsub.f32 %v519, %v1297
        %v1330 = vsub.f32 %v524, %v1298
        %v1331 = vsub.f32 %v527, %v1299
        %v1332 = vsub.f32 %v532, %v1300
        %v1333 = vsub.f32 %v535, %v1301
        %v1334 = vsub.f32 %v540, %v1302
        %v1335 = vsub.f32 %v543, %v1303
        %v1336 = vsub.f32 %v548, %v1304
        %v1337 = vsub.f32 %v551, %v1305
        %v1338 = vmul.f32 %v1306, %v1306
        %v1339 = vmul.f32 %v1307, %v1307
        %v1340 = vmul.f32 %v1308, %v1308
        %v1341 = vmul.f32 %v1309, %v1309
        %v1342 = vmul.f32 %v1310, %v1310
        %v1343 = vmul.f32 %v1311, %v1311
        %v1344 = vmul.f32 %v1312, %v1312
        %v1345 = vmul.f32 %v1313, %v1313
        %v1346 = vmul.f32 %v1314, %v1314
        %v1347 = vmul.f32 %v1315, %v1315
        %v1348 = vmul.f32 %v1316, %v1316
        %v1349 = vmul.f32 %v1317, %v1317
        %v1350 = vmul.f32 %v1318, %v1318
        %v1351 = vmul.f32 %v1319, %v1319
        %v1352 = vmul.f32 %v1320, %v1320
        %v1353 = vmul.f32 %v1321, %v1321
        %v1354 = vmul.f32 %v1322, %v1322
        %v1355 = vmul.f32 %v1323, %v1323
        %v1356 = vmul.f32 %v1324, %v1324
        %v1357 = vmul.f32 %v1325, %v1325
        %v1358 = vmul.f32 %v1326, %v1326
        %v1359 = vmul.f32 %v1327, %v1327
        %v1360 = vmul.f32 %v1328, %v1328
        %v1361 = vmul.f32 %v1329, %v1329
        %v1362 = vmul.f32 %v1330, %v1330
        %v1363 = vmul.f32 %v1331, %v1331
        %v1364 = vmul.f32 %v1332, %v1332
        %v1365 = vmul.f32 %v1333, %v1333
        %v1366 = vmul.f32 %v1334, %v1334
        %v1367 = vmul.f32 %v1335, %v1335
        %v1368 = vmul.f32 %v1336, %v1336
        %v1369 = vmul.f32 %v1337, %v1337
        %1402 = vrot.lane.b32.xlu0 %v1338, 96
        %v1403 = vpop.permute.xlu0 %1402
        %1404 = vrot.lane.b32.xlu0 %v1339, 96
        %v1405 = vpop.permute.xlu0 %1404
        %1406 = vrot.lane.b32.xlu0 %v1340, 96
        %v1407 = vpop.permute.xlu0 %1406
        %1408 = vrot.lane.b32.xlu0 %v1341, 96
        %v1409 = vpop.permute.xlu0 %1408
        %1410 = vrot.lane.b32.xlu0 %v1342, 96
        %v1411 = vpop.permute.xlu0 %1410
        %1412 = vrot.lane.b32.xlu0 %v1343, 96
        %v1413 = vpop.permute.xlu0 %1412
        %1414 = vrot.lane.b32.xlu0 %v1344, 96
        %v1415 = vpop.permute.xlu0 %1414
        %1416 = vrot.lane.b32.xlu0 %v1345, 96
        %v1417 = vpop.permute.xlu0 %1416
        %1418 = vrot.lane.b32.xlu0 %v1346, 96
        %v1419 = vpop.permute.xlu0 %1418
        %1420 = vrot.lane.b32.xlu0 %v1347, 96
        %v1421 = vpop.permute.xlu0 %1420
        %1422 = vrot.lane.b32.xlu0 %v1348, 96
        %v1423 = vpop.permute.xlu0 %1422
        %1424 = vrot.lane.b32.xlu0 %v1349, 96
        %v1425 = vpop.permute.xlu0 %1424
        %1426 = vrot.lane.b32.xlu0 %v1350, 96
        %v1427 = vpop.permute.xlu0 %1426
        %1428 = vrot.lane.b32.xlu0 %v1351, 96
        %v1429 = vpop.permute.xlu0 %1428
        %1430 = vrot.lane.b32.xlu0 %v1352, 96
        %v1431 = vpop.permute.xlu0 %1430
        %1432 = vrot.lane.b32.xlu0 %v1353, 96
        %v1433 = vpop.permute.xlu0 %1432
        %1434 = vrot.lane.b32.xlu0 %v1354, 96
        %v1435 = vpop.permute.xlu0 %1434
        %1436 = vrot.lane.b32.xlu0 %v1355, 96
        %v1437 = vpop.permute.xlu0 %1436
        %1438 = vrot.lane.b32.xlu0 %v1356, 96
        %v1439 = vpop.permute.xlu0 %1438
        %1440 = vrot.lane.b32.xlu0 %v1357, 96
        %v1441 = vpop.permute.xlu0 %1440
        %1442 = vrot.lane.b32.xlu0 %v1358, 96
        %v1443 = vpop.permute.xlu0 %1442
        %1444 = vrot.lane.b32.xlu0 %v1359, 96
        %v1445 = vpop.permute.xlu0 %1444
        %1446 = vrot.lane.b32.xlu0 %v1360, 96
        %v1447 = vpop.permute.xlu0 %1446
        %1448 = vrot.lane.b32.xlu0 %v1361, 96
        %v1449 = vpop.permute.xlu0 %1448
        %1450 = vrot.lane.b32.xlu0 %v1362, 96
        %v1451 = vpop.permute.xlu0 %1450
        %1452 = vrot.lane.b32.xlu0 %v1363, 96
        %v1453 = vpop.permute.xlu0 %1452
        %1454 = vrot.lane.b32.xlu0 %v1364, 96
        %v1455 = vpop.permute.xlu0 %1454
        %1456 = vrot.lane.b32.xlu0 %v1365, 96
        %v1457 = vpop.permute.xlu0 %1456
        %1458 = vrot.lane.b32.xlu0 %v1366, 96
        %v1459 = vpop.permute.xlu0 %1458
        %1460 = vrot.lane.b32.xlu0 %v1367, 96
        %v1461 = vpop.permute.xlu0 %1460
        %1462 = vrot.lane.b32.xlu0 %v1368, 96
        %v1463 = vpop.permute.xlu0 %1462
        %1464 = vrot.lane.b32.xlu0 %v1369, 96
        %v1465 = vpop.permute.xlu0 %1464
        %v1498 = vsel %vm556, %v1403, 0.0
        %1499 = vadd.xlane.f32.xlu0 %v1498
        %v1500 = vpop.xlane.xlu0 %1499
        %v1501 = vsel %vm556, %v1405, 0.0
        %1502 = vadd.xlane.f32.xlu0 %v1501
        %v1503 = vpop.xlane.xlu0 %1502
        %v1504 = vsel %vm556, %v1407, 0.0
        %1505 = vadd.xlane.f32.xlu0 %v1504
        %v1506 = vpop.xlane.xlu0 %1505
        %v1507 = vsel %vm556, %v1409, 0.0
        %1508 = vadd.xlane.f32.xlu0 %v1507
        %v1509 = vpop.xlane.xlu0 %1508
        %v1510 = vsel %vm556, %v1411, 0.0
        %1511 = vadd.xlane.f32.xlu0 %v1510
        %v1512 = vpop.xlane.xlu0 %1511
        %v1513 = vsel %vm556, %v1413, 0.0
        %1514 = vadd.xlane.f32.xlu0 %v1513
        %v1515 = vpop.xlane.xlu0 %1514
        %v1516 = vsel %vm556, %v1415, 0.0
        %1517 = vadd.xlane.f32.xlu0 %v1516
        %v1518 = vpop.xlane.xlu0 %1517
        %v1519 = vsel %vm556, %v1417, 0.0
        %1520 = vadd.xlane.f32.xlu0 %v1519
        %v1521 = vpop.xlane.xlu0 %1520
        %v1522 = vsel %vm556, %v1419, 0.0
        %1523 = vadd.xlane.f32.xlu0 %v1522
        %v1524 = vpop.xlane.xlu0 %1523
        %v1525 = vsel %vm556, %v1421, 0.0
        %1526 = vadd.xlane.f32.xlu0 %v1525
        %v1527 = vpop.xlane.xlu0 %1526
        %v1528 = vsel %vm556, %v1423, 0.0
        %1529 = vadd.xlane.f32.xlu0 %v1528
        %v1530 = vpop.xlane.xlu0 %1529
        %v1531 = vsel %vm556, %v1425, 0.0
        %1532 = vadd.xlane.f32.xlu0 %v1531
        %v1533 = vpop.xlane.xlu0 %1532
        %v1534 = vsel %vm556, %v1427, 0.0
        %1535 = vadd.xlane.f32.xlu0 %v1534
        %v1536 = vpop.xlane.xlu0 %1535
        %v1537 = vsel %vm556, %v1429, 0.0
        %1538 = vadd.xlane.f32.xlu0 %v1537
        %v1539 = vpop.xlane.xlu0 %1538
        %v1540 = vsel %vm556, %v1431, 0.0
        %1541 = vadd.xlane.f32.xlu0 %v1540
        %v1542 = vpop.xlane.xlu0 %1541
        %v1543 = vsel %vm556, %v1433, 0.0
        %1544 = vadd.xlane.f32.xlu0 %v1543
        %v1545 = vpop.xlane.xlu0 %1544
        %v1546 = vsel %vm556, %v1435, 0.0
        %1547 = vadd.xlane.f32.xlu0 %v1546
        %v1548 = vpop.xlane.xlu0 %1547
        %v1549 = vsel %vm556, %v1437, 0.0
        %1550 = vadd.xlane.f32.xlu0 %v1549
        %v1551 = vpop.xlane.xlu0 %1550
        %v1552 = vsel %vm556, %v1439, 0.0
        %1553 = vadd.xlane.f32.xlu0 %v1552
        %v1554 = vpop.xlane.xlu0 %1553
        %v1555 = vsel %vm556, %v1441, 0.0
        %1556 = vadd.xlane.f32.xlu0 %v1555
        %v1557 = vpop.xlane.xlu0 %1556
        %v1558 = vsel %vm556, %v1443, 0.0
        %1559 = vadd.xlane.f32.xlu0 %v1558
        %v1560 = vpop.xlane.xlu0 %1559
        %v1561 = vsel %vm556, %v1445, 0.0
        %1562 = vadd.xlane.f32.xlu0 %v1561
        %v1563 = vpop.xlane.xlu0 %1562
        %v1564 = vsel %vm556, %v1447, 0.0
        %1565 = vadd.xlane.f32.xlu0 %v1564
        %v1566 = vpop.xlane.xlu0 %1565
        %v1567 = vsel %vm556, %v1449, 0.0
        %1568 = vadd.xlane.f32.xlu0 %v1567
        %v1569 = vpop.xlane.xlu0 %1568
        %v1570 = vsel %vm556, %v1451, 0.0
        %1571 = vadd.xlane.f32.xlu0 %v1570
        %v1572 = vpop.xlane.xlu0 %1571
        %v1573 = vsel %vm556, %v1453, 0.0
        %1574 = vadd.xlane.f32.xlu0 %v1573
        %v1575 = vpop.xlane.xlu0 %1574
        %v1576 = vsel %vm556, %v1455, 0.0
        %1577 = vadd.xlane.f32.xlu0 %v1576
        %v1578 = vpop.xlane.xlu0 %1577
        %v1579 = vsel %vm556, %v1457, 0.0
        %1580 = vadd.xlane.f32.xlu0 %v1579
        %v1581 = vpop.xlane.xlu0 %1580
        %v1582 = vsel %vm556, %v1459, 0.0
        %1583 = vadd.xlane.f32.xlu0 %v1582
        %v1584 = vpop.xlane.xlu0 %1583
        %v1585 = vsel %vm556, %v1461, 0.0
        %1586 = vadd.xlane.f32.xlu0 %v1585
        %v1587 = vpop.xlane.xlu0 %1586
        %v1588 = vsel %vm556, %v1463, 0.0
        %1589 = vadd.xlane.f32.xlu0 %v1588
        %v1590 = vpop.xlane.xlu0 %1589
        %v1591 = vsel %vm556, %v1465, 0.0
        %1592 = vadd.xlane.f32.xlu0 %v1591
        %v1593 = vpop.xlane.xlu0 %1592
        %v1594 = vmul.f32 %v1500, %v653
        %v1595 = vmul.f32 %v1503, %v653
        %v1596 = vmul.f32 %v1506, %v653
        %v1597 = vmul.f32 %v1509, %v653
        %v1598 = vmul.f32 %v1512, %v653
        %v1599 = vmul.f32 %v1515, %v653
        %v1600 = vmul.f32 %v1518, %v653
        %v1601 = vmul.f32 %v1521, %v653
        %v1602 = vmul.f32 %v1524, %v653
        %v1603 = vmul.f32 %v1527, %v653
        %v1604 = vmul.f32 %v1530, %v653
        %v1605 = vmul.f32 %v1533, %v653
        %v1606 = vmul.f32 %v1536, %v653
        %v1607 = vmul.f32 %v1539, %v653
        %v1608 = vmul.f32 %v1542, %v653
        %v1609 = vmul.f32 %v1545, %v653
        %v1610 = vmul.f32 %v1548, %v653
        %v1611 = vmul.f32 %v1551, %v653
        %v1612 = vmul.f32 %v1554, %v653
        %v1613 = vmul.f32 %v1557, %v653
        %v1614 = vmul.f32 %v1560, %v653
        %v1615 = vmul.f32 %v1563, %v653
        %v1616 = vmul.f32 %v1566, %v653
        %v1617 = vmul.f32 %v1569, %v653
        %v1618 = vmul.f32 %v1572, %v653
        %v1619 = vmul.f32 %v1575, %v653
        %v1620 = vmul.f32 %v1578, %v653
        %v1621 = vmul.f32 %v1581, %v653
        %v1622 = vmul.f32 %v1584, %v653
        %v1623 = vmul.f32 %v1587, %v653
        %v1624 = vmul.f32 %v1590, %v653
        %v1625 = vmul.f32 %v1593, %v653
        %v1626 = vadd.f32 %v1594, 1e-05
        %v1627 = vadd.f32 %v1595, 1e-05
        %v1628 = vadd.f32 %v1596, 1e-05
        %v1629 = vadd.f32 %v1597, 1e-05
        %v1630 = vadd.f32 %v1598, 1e-05
        %v1631 = vadd.f32 %v1599, 1e-05
        %v1632 = vadd.f32 %v1600, 1e-05
        %v1633 = vadd.f32 %v1601, 1e-05
        %v1634 = vadd.f32 %v1602, 1e-05
        %v1635 = vadd.f32 %v1603, 1e-05
        %v1636 = vadd.f32 %v1604, 1e-05
        %v1637 = vadd.f32 %v1605, 1e-05
        %v1638 = vadd.f32 %v1606, 1e-05
        %v1639 = vadd.f32 %v1607, 1e-05
        %v1640 = vadd.f32 %v1608, 1e-05
        %v1641 = vadd.f32 %v1609, 1e-05
        %v1642 = vadd.f32 %v1610, 1e-05
        %v1643 = vadd.f32 %v1611, 1e-05
        %v1644 = vadd.f32 %v1612, 1e-05
        %v1645 = vadd.f32 %v1613, 1e-05
        %v1646 = vadd.f32 %v1614, 1e-05
        %v1647 = vadd.f32 %v1615, 1e-05
        %v1648 = vadd.f32 %v1616, 1e-05
        %v1649 = vadd.f32 %v1617, 1e-05
        %v1650 = vadd.f32 %v1618, 1e-05
        %v1651 = vadd.f32 %v1619, 1e-05
        %v1652 = vadd.f32 %v1620, 1e-05
        %v1653 = vadd.f32 %v1621, 1e-05
        %v1654 = vadd.f32 %v1622, 1e-05
        %v1655 = vadd.f32 %v1623, 1e-05
        %v1656 = vadd.f32 %v1624, 1e-05
        %v1657 = vadd.f32 %v1625, 1e-05
        %v1658 = vrsqrt.pop %v1626
        %v1659 = vrsqrt.pop %v1627
        %v1660 = vrsqrt.pop %v1628
        %v1661 = vrsqrt.pop %v1629
        %v1662 = vrsqrt.pop %v1630
        %v1663 = vrsqrt.pop %v1631
        %v1664 = vrsqrt.pop %v1632
        %v1665 = vrsqrt.pop %v1633
        %v1666 = vrsqrt.pop %v1634
        %v1667 = vrsqrt.pop %v1635
        %v1668 = vrsqrt.pop %v1636
        %v1669 = vrsqrt.pop %v1637
        %v1670 = vrsqrt.pop %v1638
        %v1671 = vrsqrt.pop %v1639
        %v1672 = vrsqrt.pop %v1640
        %v1673 = vrsqrt.pop %v1641
        %v1674 = vrsqrt.pop %v1642
        %v1675 = vrsqrt.pop %v1643
        %v1676 = vrsqrt.pop %v1644
        %v1677 = vrsqrt.pop %v1645
        %v1678 = vrsqrt.pop %v1646
        %v1679 = vrsqrt.pop %v1647
        %v1680 = vrsqrt.pop %v1648
        %v1681 = vrsqrt.pop %v1649
        %v1682 = vrsqrt.pop %v1650
        %v1683 = vrsqrt.pop %v1651
        %v1684 = vrsqrt.pop %v1652
        %v1685 = vrsqrt.pop %v1653
        %v1686 = vrsqrt.pop %v1654
        %v1687 = vrsqrt.pop %v1655
        %v1688 = vrsqrt.pop %v1656
        %v1689 = vrsqrt.pop %v1657
        %v1690 = vmul.f32 %v1306, %v1658
        %v1691 = vmul.f32 %v1307, %v1659
        %v1692 = vmul.f32 %v1308, %v1660
        %v1693 = vmul.f32 %v1309, %v1661
        %v1694 = vmul.f32 %v1310, %v1662
        %v1695 = vmul.f32 %v1311, %v1663
        %v1696 = vmul.f32 %v1312, %v1664
        %v1697 = vmul.f32 %v1313, %v1665
        %v1698 = vmul.f32 %v1314, %v1666
        %v1699 = vmul.f32 %v1315, %v1667
        %v1700 = vmul.f32 %v1316, %v1668
        %v1701 = vmul.f32 %v1317, %v1669
        %v1702 = vmul.f32 %v1318, %v1670
        %v1703 = vmul.f32 %v1319, %v1671
        %v1704 = vmul.f32 %v1320, %v1672
        %v1705 = vmul.f32 %v1321, %v1673
        %v1706 = vmul.f32 %v1322, %v1674
        %v1707 = vmul.f32 %v1323, %v1675
        %v1708 = vmul.f32 %v1324, %v1676
        %v1709 = vmul.f32 %v1325, %v1677
        %v1710 = vmul.f32 %v1326, %v1678
        %v1711 = vmul.f32 %v1327, %v1679
        %v1712 = vmul.f32 %v1328, %v1680
        %v1713 = vmul.f32 %v1329, %v1681
        %v1714 = vmul.f32 %v1330, %v1682
        %v1715 = vmul.f32 %v1331, %v1683
        %v1716 = vmul.f32 %v1332, %v1684
        %v1717 = vmul.f32 %v1333, %v1685
        %v1718 = vmul.f32 %v1334, %v1686
        %v1719 = vmul.f32 %v1335, %v1687
        %v1720 = vmul.f32 %v1336, %v1688
        %v1721 = vmul.f32 %v1337, %v1689
        %1722 = vrot.lane.b32.xlu0 %v978, 32
        %v1723 = vpop.permute.xlu0 %1722
        %v1725 = vmul.f32 %v1690, %v1723
        %v1726 = vmul.f32 %v1691, %v1723
        %v1727 = vmul.f32 %v1692, %v1723
        %v1728 = vmul.f32 %v1693, %v1723
        %v1729 = vmul.f32 %v1694, %v1723
        %v1730 = vmul.f32 %v1695, %v1723
        %v1731 = vmul.f32 %v1696, %v1723
        %v1732 = vmul.f32 %v1697, %v1723
        %v1733 = vmul.f32 %v1698, %v1723
        %v1734 = vmul.f32 %v1699, %v1723
        %v1735 = vmul.f32 %v1700, %v1723
        %v1736 = vmul.f32 %v1701, %v1723
        %v1737 = vmul.f32 %v1702, %v1723
        %v1738 = vmul.f32 %v1703, %v1723
        %v1739 = vmul.f32 %v1704, %v1723
        %v1740 = vmul.f32 %v1705, %v1723
        %v1741 = vmul.f32 %v1706, %v1723
        %v1742 = vmul.f32 %v1707, %v1723
        %v1743 = vmul.f32 %v1708, %v1723
        %v1744 = vmul.f32 %v1709, %v1723
        %v1745 = vmul.f32 %v1710, %v1723
        %v1746 = vmul.f32 %v1711, %v1723
        %v1747 = vmul.f32 %v1712, %v1723
        %v1748 = vmul.f32 %v1713, %v1723
        %v1749 = vmul.f32 %v1714, %v1723
        %v1750 = vmul.f32 %v1715, %v1723
        %v1751 = vmul.f32 %v1716, %v1723
        %v1752 = vmul.f32 %v1717, %v1723
        %v1753 = vmul.f32 %v1718, %v1723
        %v1754 = vmul.f32 %v1719, %v1723
        %v1755 = vmul.f32 %v1720, %v1723
        %v1756 = vmul.f32 %v1721, %v1723
        %1757 = vrot.lane.b32.xlu0 %v1016, 32
        %v1758 = vpop.permute.xlu0 %1757
        %v1760 = vadd.f32 %v1725, %v1758
        %v1761 = vadd.f32 %v1726, %v1758
        %v1762 = vadd.f32 %v1727, %v1758
        %v1763 = vadd.f32 %v1728, %v1758
        %v1764 = vadd.f32 %v1729, %v1758
        %v1765 = vadd.f32 %v1730, %v1758
        %v1766 = vadd.f32 %v1731, %v1758
        %v1767 = vadd.f32 %v1732, %v1758
        %v1768 = vadd.f32 %v1733, %v1758
        %v1769 = vadd.f32 %v1734, %v1758
        %v1770 = vadd.f32 %v1735, %v1758
        %v1771 = vadd.f32 %v1736, %v1758
        %v1772 = vadd.f32 %v1737, %v1758
        %v1773 = vadd.f32 %v1738, %v1758
        %v1774 = vadd.f32 %v1739, %v1758
        %v1775 = vadd.f32 %v1740, %v1758
        %v1776 = vadd.f32 %v1741, %v1758
        %v1777 = vadd.f32 %v1742, %v1758
        %v1778 = vadd.f32 %v1743, %v1758
        %v1779 = vadd.f32 %v1744, %v1758
        %v1780 = vadd.f32 %v1745, %v1758
        %v1781 = vadd.f32 %v1746, %v1758
        %v1782 = vadd.f32 %v1747, %v1758
        %v1783 = vadd.f32 %v1748, %v1758
        %v1784 = vadd.f32 %v1749, %v1758
        %v1785 = vadd.f32 %v1750, %v1758
        %v1786 = vadd.f32 %v1751, %v1758
        %v1787 = vadd.f32 %v1752, %v1758
        %v1788 = vadd.f32 %v1753, %v1758
        %v1789 = vadd.f32 %v1754, %v1758
        %v1790 = vadd.f32 %v1755, %v1758
        %v1791 = vadd.f32 %v1756, %v1758
        %1792 = vrot.lane.b32.xlu0 %v428, 64
        %v1793 = vpop.permute.xlu0 %1792
        %1794 = vrot.lane.b32.xlu0 %v431, 64
        %v1795 = vpop.permute.xlu0 %1794
        %1796 = vrot.lane.b32.xlu0 %v436, 64
        %v1797 = vpop.permute.xlu0 %1796
        %1798 = vrot.lane.b32.xlu0 %v439, 64
        %v1799 = vpop.permute.xlu0 %1798
        %1800 = vrot.lane.b32.xlu0 %v444, 64
        %v1801 = vpop.permute.xlu0 %1800
        %1802 = vrot.lane.b32.xlu0 %v447, 64
        %v1803 = vpop.permute.xlu0 %1802
        %1804 = vrot.lane.b32.xlu0 %v452, 64
        %v1805 = vpop.permute.xlu0 %1804
        %1806 = vrot.lane.b32.xlu0 %v455, 64
        %v1807 = vpop.permute.xlu0 %1806
        %1808 = vrot.lane.b32.xlu0 %v460, 64
        %v1809 = vpop.permute.xlu0 %1808
        %1810 = vrot.lane.b32.xlu0 %v463, 64
        %v1811 = vpop.permute.xlu0 %1810
        %1812 = vrot.lane.b32.xlu0 %v468, 64
        %v1813 = vpop.permute.xlu0 %1812
        %1814 = vrot.lane.b32.xlu0 %v471, 64
        %v1815 = vpop.permute.xlu0 %1814
        %1816 = vrot.lane.b32.xlu0 %v476, 64
        %v1817 = vpop.permute.xlu0 %1816
        %1818 = vrot.lane.b32.xlu0 %v479, 64
        %v1819 = vpop.permute.xlu0 %1818
        %1820 = vrot.lane.b32.xlu0 %v484, 64
        %v1821 = vpop.permute.xlu0 %1820
        %1822 = vrot.lane.b32.xlu0 %v487, 64
        %v1823 = vpop.permute.xlu0 %1822
        %1824 = vrot.lane.b32.xlu0 %v492, 64
        %v1825 = vpop.permute.xlu0 %1824
        %1826 = vrot.lane.b32.xlu0 %v495, 64
        %v1827 = vpop.permute.xlu0 %1826
        %1828 = vrot.lane.b32.xlu0 %v500, 64
        %v1829 = vpop.permute.xlu0 %1828
        %1830 = vrot.lane.b32.xlu0 %v503, 64
        %v1831 = vpop.permute.xlu0 %1830
        %1832 = vrot.lane.b32.xlu0 %v508, 64
        %v1833 = vpop.permute.xlu0 %1832
        %1834 = vrot.lane.b32.xlu0 %v511, 64
        %v1835 = vpop.permute.xlu0 %1834
        %1836 = vrot.lane.b32.xlu0 %v516, 64
        %v1837 = vpop.permute.xlu0 %1836
        %1838 = vrot.lane.b32.xlu0 %v519, 64
        %v1839 = vpop.permute.xlu0 %1838
        %1840 = vrot.lane.b32.xlu0 %v524, 64
        %v1841 = vpop.permute.xlu0 %1840
        %1842 = vrot.lane.b32.xlu0 %v527, 64
        %v1843 = vpop.permute.xlu0 %1842
        %1844 = vrot.lane.b32.xlu0 %v532, 64
        %v1845 = vpop.permute.xlu0 %1844
        %1846 = vrot.lane.b32.xlu0 %v535, 64
        %v1847 = vpop.permute.xlu0 %1846
        %1848 = vrot.lane.b32.xlu0 %v540, 64
        %v1849 = vpop.permute.xlu0 %1848
        %1850 = vrot.lane.b32.xlu0 %v543, 64
        %v1851 = vpop.permute.xlu0 %1850
        %1852 = vrot.lane.b32.xlu0 %v548, 64
        %v1853 = vpop.permute.xlu0 %1852
        %1854 = vrot.lane.b32.xlu0 %v551, 64
        %v1855 = vpop.permute.xlu0 %1854
        %v1888 = vsel %vm556, %v1793, 0.0
        %1889 = vadd.xlane.f32.xlu0 %v1888
        %v1890 = vpop.xlane.xlu0 %1889
        %v1891 = vsel %vm556, %v1795, 0.0
        %1892 = vadd.xlane.f32.xlu0 %v1891
        %v1893 = vpop.xlane.xlu0 %1892
        %v1894 = vsel %vm556, %v1797, 0.0
        %1895 = vadd.xlane.f32.xlu0 %v1894
        %v1896 = vpop.xlane.xlu0 %1895
        %v1897 = vsel %vm556, %v1799, 0.0
        %1898 = vadd.xlane.f32.xlu0 %v1897
        %v1899 = vpop.xlane.xlu0 %1898
        %v1900 = vsel %vm556, %v1801, 0.0
        %1901 = vadd.xlane.f32.xlu0 %v1900
        %v1902 = vpop.xlane.xlu0 %1901
        %v1903 = vsel %vm556, %v1803, 0.0
        %1904 = vadd.xlane.f32.xlu0 %v1903
        %v1905 = vpop.xlane.xlu0 %1904
        %v1906 = vsel %vm556, %v1805, 0.0
        %1907 = vadd.xlane.f32.xlu0 %v1906
        %v1908 = vpop.xlane.xlu0 %1907
        %v1909 = vsel %vm556, %v1807, 0.0
        %1910 = vadd.xlane.f32.xlu0 %v1909
        %v1911 = vpop.xlane.xlu0 %1910
        %v1912 = vsel %vm556, %v1809, 0.0
        %1913 = vadd.xlane.f32.xlu0 %v1912
        %v1914 = vpop.xlane.xlu0 %1913
        %v1915 = vsel %vm556, %v1811, 0.0
        %1916 = vadd.xlane.f32.xlu0 %v1915
        %v1917 = vpop.xlane.xlu0 %1916
        %v1918 = vsel %vm556, %v1813, 0.0
        %1919 = vadd.xlane.f32.xlu0 %v1918
        %v1920 = vpop.xlane.xlu0 %1919
        %v1921 = vsel %vm556, %v1815, 0.0
        %1922 = vadd.xlane.f32.xlu0 %v1921
        %v1923 = vpop.xlane.xlu0 %1922
        %v1924 = vsel %vm556, %v1817, 0.0
        %1925 = vadd.xlane.f32.xlu0 %v1924
        %v1926 = vpop.xlane.xlu0 %1925
        %v1927 = vsel %vm556, %v1819, 0.0
        %1928 = vadd.xlane.f32.xlu0 %v1927
        %v1929 = vpop.xlane.xlu0 %1928
        %v1930 = vsel %vm556, %v1821, 0.0
        %1931 = vadd.xlane.f32.xlu0 %v1930
        %v1932 = vpop.xlane.xlu0 %1931
        %v1933 = vsel %vm556, %v1823, 0.0
        %1934 = vadd.xlane.f32.xlu0 %v1933
        %v1935 = vpop.xlane.xlu0 %1934
        %v1936 = vsel %vm556, %v1825, 0.0
        %1937 = vadd.xlane.f32.xlu0 %v1936
        %v1938 = vpop.xlane.xlu0 %1937
        %v1939 = vsel %vm556, %v1827, 0.0
        %1940 = vadd.xlane.f32.xlu0 %v1939
        %v1941 = vpop.xlane.xlu0 %1940
        %v1942 = vsel %vm556, %v1829, 0.0
        %1943 = vadd.xlane.f32.xlu0 %v1942
        %v1944 = vpop.xlane.xlu0 %1943
        %v1945 = vsel %vm556, %v1831, 0.0
        %1946 = vadd.xlane.f32.xlu0 %v1945
        %v1947 = vpop.xlane.xlu0 %1946
        %v1948 = vsel %vm556, %v1833, 0.0
        %1949 = vadd.xlane.f32.xlu0 %v1948
        %v1950 = vpop.xlane.xlu0 %1949
        %v1951 = vsel %vm556, %v1835, 0.0
        %1952 = vadd.xlane.f32.xlu0 %v1951
        %v1953 = vpop.xlane.xlu0 %1952
        %v1954 = vsel %vm556, %v1837, 0.0
        %1955 = vadd.xlane.f32.xlu0 %v1954
        %v1956 = vpop.xlane.xlu0 %1955
        %v1957 = vsel %vm556, %v1839, 0.0
        %1958 = vadd.xlane.f32.xlu0 %v1957
        %v1959 = vpop.xlane.xlu0 %1958
        %v1960 = vsel %vm556, %v1841, 0.0
        %1961 = vadd.xlane.f32.xlu0 %v1960
        %v1962 = vpop.xlane.xlu0 %1961
        %v1963 = vsel %vm556, %v1843, 0.0
        %1964 = vadd.xlane.f32.xlu0 %v1963
        %v1965 = vpop.xlane.xlu0 %1964
        %v1966 = vsel %vm556, %v1845, 0.0
        %1967 = vadd.xlane.f32.xlu0 %v1966
        %v1968 = vpop.xlane.xlu0 %1967
        %v1969 = vsel %vm556, %v1847, 0.0
        %1970 = vadd.xlane.f32.xlu0 %v1969
        %v1971 = vpop.xlane.xlu0 %1970
        %v1972 = vsel %vm556, %v1849, 0.0
        %1973 = vadd.xlane.f32.xlu0 %v1972
        %v1974 = vpop.xlane.xlu0 %1973
        %v1975 = vsel %vm556, %v1851, 0.0
        %1976 = vadd.xlane.f32.xlu0 %v1975
        %v1977 = vpop.xlane.xlu0 %1976
        %v1978 = vsel %vm556, %v1853, 0.0
        %1979 = vadd.xlane.f32.xlu0 %v1978
        %v1980 = vpop.xlane.xlu0 %1979
        %v1981 = vsel %vm556, %v1855, 0.0
        %1982 = vadd.xlane.f32.xlu0 %v1981
        %v1983 = vpop.xlane.xlu0 %1982
        %v1984 = vmul.f32 %v1890, %v653
        %v1985 = vmul.f32 %v1893, %v653
        %v1986 = vmul.f32 %v1896, %v653
        %v1987 = vmul.f32 %v1899, %v653
        %v1988 = vmul.f32 %v1902, %v653
        %v1989 = vmul.f32 %v1905, %v653
        %v1990 = vmul.f32 %v1908, %v653
        %v1991 = vmul.f32 %v1911, %v653
        %v1992 = vmul.f32 %v1914, %v653
        %v1993 = vmul.f32 %v1917, %v653
        %v1994 = vmul.f32 %v1920, %v653
        %v1995 = vmul.f32 %v1923, %v653
        %v1996 = vmul.f32 %v1926, %v653
        %v1997 = vmul.f32 %v1929, %v653
        %v1998 = vmul.f32 %v1932, %v653
        %v1999 = vmul.f32 %v1935, %v653
        %v2000 = vmul.f32 %v1938, %v653
        %v2001 = vmul.f32 %v1941, %v653
        %v2002 = vmul.f32 %v1944, %v653
        %v2003 = vmul.f32 %v1947, %v653
        %v2004 = vmul.f32 %v1950, %v653
        %v2005 = vmul.f32 %v1953, %v653
        %v2006 = vmul.f32 %v1956, %v653
        %v2007 = vmul.f32 %v1959, %v653
        %v2008 = vmul.f32 %v1962, %v653
        %v2009 = vmul.f32 %v1965, %v653
        %v2010 = vmul.f32 %v1968, %v653
        %v2011 = vmul.f32 %v1971, %v653
        %v2012 = vmul.f32 %v1974, %v653
        %v2013 = vmul.f32 %v1977, %v653
        %v2014 = vmul.f32 %v1980, %v653
        %v2015 = vmul.f32 %v1983, %v653
        %v2016 = vsub.f32 %v428, %v1984
        %v2017 = vsub.f32 %v431, %v1985
        %v2018 = vsub.f32 %v436, %v1986
        %v2019 = vsub.f32 %v439, %v1987
        %v2020 = vsub.f32 %v444, %v1988
        %v2021 = vsub.f32 %v447, %v1989
        %v2022 = vsub.f32 %v452, %v1990
        %v2023 = vsub.f32 %v455, %v1991
        %v2024 = vsub.f32 %v460, %v1992
        %v2025 = vsub.f32 %v463, %v1993
        %v2026 = vsub.f32 %v468, %v1994
        %v2027 = vsub.f32 %v471, %v1995
        %v2028 = vsub.f32 %v476, %v1996
        %v2029 = vsub.f32 %v479, %v1997
        %v2030 = vsub.f32 %v484, %v1998
        %v2031 = vsub.f32 %v487, %v1999
        %v2032 = vsub.f32 %v492, %v2000
        %v2033 = vsub.f32 %v495, %v2001
        %v2034 = vsub.f32 %v500, %v2002
        %v2035 = vsub.f32 %v503, %v2003
        %v2036 = vsub.f32 %v508, %v2004
        %v2037 = vsub.f32 %v511, %v2005
        %v2038 = vsub.f32 %v516, %v2006
        %v2039 = vsub.f32 %v519, %v2007
        %v2040 = vsub.f32 %v524, %v2008
        %v2041 = vsub.f32 %v527, %v2009
        %v2042 = vsub.f32 %v532, %v2010
        %v2043 = vsub.f32 %v535, %v2011
        %v2044 = vsub.f32 %v540, %v2012
        %v2045 = vsub.f32 %v543, %v2013
        %v2046 = vsub.f32 %v548, %v2014
        %v2047 = vsub.f32 %v551, %v2015
        %v2048 = vmul.f32 %v2016, %v2016
        %v2049 = vmul.f32 %v2017, %v2017
        %v2050 = vmul.f32 %v2018, %v2018
        %v2051 = vmul.f32 %v2019, %v2019
        %v2052 = vmul.f32 %v2020, %v2020
        %v2053 = vmul.f32 %v2021, %v2021
        %v2054 = vmul.f32 %v2022, %v2022
        %v2055 = vmul.f32 %v2023, %v2023
        %v2056 = vmul.f32 %v2024, %v2024
        %v2057 = vmul.f32 %v2025, %v2025
        %v2058 = vmul.f32 %v2026, %v2026
        %v2059 = vmul.f32 %v2027, %v2027
        %v2060 = vmul.f32 %v2028, %v2028
        %v2061 = vmul.f32 %v2029, %v2029
        %v2062 = vmul.f32 %v2030, %v2030
        %v2063 = vmul.f32 %v2031, %v2031
        %v2064 = vmul.f32 %v2032, %v2032
        %v2065 = vmul.f32 %v2033, %v2033
        %v2066 = vmul.f32 %v2034, %v2034
        %v2067 = vmul.f32 %v2035, %v2035
        %v2068 = vmul.f32 %v2036, %v2036
        %v2069 = vmul.f32 %v2037, %v2037
        %v2070 = vmul.f32 %v2038, %v2038
        %v2071 = vmul.f32 %v2039, %v2039
        %v2072 = vmul.f32 %v2040, %v2040
        %v2073 = vmul.f32 %v2041, %v2041
        %v2074 = vmul.f32 %v2042, %v2042
        %v2075 = vmul.f32 %v2043, %v2043
        %v2076 = vmul.f32 %v2044, %v2044
        %v2077 = vmul.f32 %v2045, %v2045
        %v2078 = vmul.f32 %v2046, %v2046
        %v2079 = vmul.f32 %v2047, %v2047
        %2112 = vrot.lane.b32.xlu0 %v2048, 64
        %v2113 = vpop.permute.xlu0 %2112
        %2114 = vrot.lane.b32.xlu0 %v2049, 64
        %v2115 = vpop.permute.xlu0 %2114
        %2116 = vrot.lane.b32.xlu0 %v2050, 64
        %v2117 = vpop.permute.xlu0 %2116
        %2118 = vrot.lane.b32.xlu0 %v2051, 64
        %v2119 = vpop.permute.xlu0 %2118
        %2120 = vrot.lane.b32.xlu0 %v2052, 64
        %v2121 = vpop.permute.xlu0 %2120
        %2122 = vrot.lane.b32.xlu0 %v2053, 64
        %v2123 = vpop.permute.xlu0 %2122
        %2124 = vrot.lane.b32.xlu0 %v2054, 64
        %v2125 = vpop.permute.xlu0 %2124
        %2126 = vrot.lane.b32.xlu0 %v2055, 64
        %v2127 = vpop.permute.xlu0 %2126
        %2128 = vrot.lane.b32.xlu0 %v2056, 64
        %v2129 = vpop.permute.xlu0 %2128
        %2130 = vrot.lane.b32.xlu0 %v2057, 64
        %v2131 = vpop.permute.xlu0 %2130
        %2132 = vrot.lane.b32.xlu0 %v2058, 64
        %v2133 = vpop.permute.xlu0 %2132
        %2134 = vrot.lane.b32.xlu0 %v2059, 64
        %v2135 = vpop.permute.xlu0 %2134
        %2136 = vrot.lane.b32.xlu0 %v2060, 64
        %v2137 = vpop.permute.xlu0 %2136
        %2138 = vrot.lane.b32.xlu0 %v2061, 64
        %v2139 = vpop.permute.xlu0 %2138
        %2140 = vrot.lane.b32.xlu0 %v2062, 64
        %v2141 = vpop.permute.xlu0 %2140
        %2142 = vrot.lane.b32.xlu0 %v2063, 64
        %v2143 = vpop.permute.xlu0 %2142
        %2144 = vrot.lane.b32.xlu0 %v2064, 64
        %v2145 = vpop.permute.xlu0 %2144
        %2146 = vrot.lane.b32.xlu0 %v2065, 64
        %v2147 = vpop.permute.xlu0 %2146
        %2148 = vrot.lane.b32.xlu0 %v2066, 64
        %v2149 = vpop.permute.xlu0 %2148
        %2150 = vrot.lane.b32.xlu0 %v2067, 64
        %v2151 = vpop.permute.xlu0 %2150
        %2152 = vrot.lane.b32.xlu0 %v2068, 64
        %v2153 = vpop.permute.xlu0 %2152
        %2154 = vrot.lane.b32.xlu0 %v2069, 64
        %v2155 = vpop.permute.xlu0 %2154
        %2156 = vrot.lane.b32.xlu0 %v2070, 64
        %v2157 = vpop.permute.xlu0 %2156
        %2158 = vrot.lane.b32.xlu0 %v2071, 64
        %v2159 = vpop.permute.xlu0 %2158
        %2160 = vrot.lane.b32.xlu0 %v2072, 64
        %v2161 = vpop.permute.xlu0 %2160
        %2162 = vrot.lane.b32.xlu0 %v2073, 64
        %v2163 = vpop.permute.xlu0 %2162
        %2164 = vrot.lane.b32.xlu0 %v2074, 64
        %v2165 = vpop.permute.xlu0 %2164
        %2166 = vrot.lane.b32.xlu0 %v2075, 64
        %v2167 = vpop.permute.xlu0 %2166
        %2168 = vrot.lane.b32.xlu0 %v2076, 64
        %v2169 = vpop.permute.xlu0 %2168
        %2170 = vrot.lane.b32.xlu0 %v2077, 64
        %v2171 = vpop.permute.xlu0 %2170
        %2172 = vrot.lane.b32.xlu0 %v2078, 64
        %v2173 = vpop.permute.xlu0 %2172
        %2174 = vrot.lane.b32.xlu0 %v2079, 64
        %v2175 = vpop.permute.xlu0 %2174
        %v2208 = vsel %vm556, %v2113, 0.0
        %2209 = vadd.xlane.f32.xlu0 %v2208
        %v2210 = vpop.xlane.xlu0 %2209
        %v2211 = vsel %vm556, %v2115, 0.0
        %2212 = vadd.xlane.f32.xlu0 %v2211
        %v2213 = vpop.xlane.xlu0 %2212
        %v2214 = vsel %vm556, %v2117, 0.0
        %2215 = vadd.xlane.f32.xlu0 %v2214
        %v2216 = vpop.xlane.xlu0 %2215
        %v2217 = vsel %vm556, %v2119, 0.0
        %2218 = vadd.xlane.f32.xlu0 %v2217
        %v2219 = vpop.xlane.xlu0 %2218
        %v2220 = vsel %vm556, %v2121, 0.0
        %2221 = vadd.xlane.f32.xlu0 %v2220
        %v2222 = vpop.xlane.xlu0 %2221
        %v2223 = vsel %vm556, %v2123, 0.0
        %2224 = vadd.xlane.f32.xlu0 %v2223
        %v2225 = vpop.xlane.xlu0 %2224
        %v2226 = vsel %vm556, %v2125, 0.0
        %2227 = vadd.xlane.f32.xlu0 %v2226
        %v2228 = vpop.xlane.xlu0 %2227
        %v2229 = vsel %vm556, %v2127, 0.0
        %2230 = vadd.xlane.f32.xlu0 %v2229
        %v2231 = vpop.xlane.xlu0 %2230
        %v2232 = vsel %vm556, %v2129, 0.0
        %2233 = vadd.xlane.f32.xlu0 %v2232
        %v2234 = vpop.xlane.xlu0 %2233
        %v2235 = vsel %vm556, %v2131, 0.0
        %2236 = vadd.xlane.f32.xlu0 %v2235
        %v2237 = vpop.xlane.xlu0 %2236
        %v2238 = vsel %vm556, %v2133, 0.0
        %2239 = vadd.xlane.f32.xlu0 %v2238
        %v2240 = vpop.xlane.xlu0 %2239
        %v2241 = vsel %vm556, %v2135, 0.0
        %2242 = vadd.xlane.f32.xlu0 %v2241
        %v2243 = vpop.xlane.xlu0 %2242
        %v2244 = vsel %vm556, %v2137, 0.0
        %2245 = vadd.xlane.f32.xlu0 %v2244
        %v2246 = vpop.xlane.xlu0 %2245
        %v2247 = vsel %vm556, %v2139, 0.0
        %2248 = vadd.xlane.f32.xlu0 %v2247
        %v2249 = vpop.xlane.xlu0 %2248
        %v2250 = vsel %vm556, %v2141, 0.0
        %2251 = vadd.xlane.f32.xlu0 %v2250
        %v2252 = vpop.xlane.xlu0 %2251
        %v2253 = vsel %vm556, %v2143, 0.0
        %2254 = vadd.xlane.f32.xlu0 %v2253
        %v2255 = vpop.xlane.xlu0 %2254
        %v2256 = vsel %vm556, %v2145, 0.0
        %2257 = vadd.xlane.f32.xlu0 %v2256
        %v2258 = vpop.xlane.xlu0 %2257
        %v2259 = vsel %vm556, %v2147, 0.0
        %2260 = vadd.xlane.f32.xlu0 %v2259
        %v2261 = vpop.xlane.xlu0 %2260
        %v2262 = vsel %vm556, %v2149, 0.0
        %2263 = vadd.xlane.f32.xlu0 %v2262
        %v2264 = vpop.xlane.xlu0 %2263
        %v2265 = vsel %vm556, %v2151, 0.0
        %2266 = vadd.xlane.f32.xlu0 %v2265
        %v2267 = vpop.xlane.xlu0 %2266
        %v2268 = vsel %vm556, %v2153, 0.0
        %2269 = vadd.xlane.f32.xlu0 %v2268
        %v2270 = vpop.xlane.xlu0 %2269
        %v2271 = vsel %vm556, %v2155, 0.0
        %2272 = vadd.xlane.f32.xlu0 %v2271
        %v2273 = vpop.xlane.xlu0 %2272
        %v2274 = vsel %vm556, %v2157, 0.0
        %2275 = vadd.xlane.f32.xlu0 %v2274
        %v2276 = vpop.xlane.xlu0 %2275
        %v2277 = vsel %vm556, %v2159, 0.0
        %2278 = vadd.xlane.f32.xlu0 %v2277
        %v2279 = vpop.xlane.xlu0 %2278
        %v2280 = vsel %vm556, %v2161, 0.0
        %2281 = vadd.xlane.f32.xlu0 %v2280
        %v2282 = vpop.xlane.xlu0 %2281
        %v2283 = vsel %vm556, %v2163, 0.0
        %2284 = vadd.xlane.f32.xlu0 %v2283
        %v2285 = vpop.xlane.xlu0 %2284
        %v2286 = vsel %vm556, %v2165, 0.0
        %2287 = vadd.xlane.f32.xlu0 %v2286
        %v2288 = vpop.xlane.xlu0 %2287
        %v2289 = vsel %vm556, %v2167, 0.0
        %2290 = vadd.xlane.f32.xlu0 %v2289
        %v2291 = vpop.xlane.xlu0 %2290
        %v2292 = vsel %vm556, %v2169, 0.0
        %2293 = vadd.xlane.f32.xlu0 %v2292
        %v2294 = vpop.xlane.xlu0 %2293
        %v2295 = vsel %vm556, %v2171, 0.0
        %2296 = vadd.xlane.f32.xlu0 %v2295
        %v2297 = vpop.xlane.xlu0 %2296
        %v2298 = vsel %vm556, %v2173, 0.0
        %2299 = vadd.xlane.f32.xlu0 %v2298
        %v2300 = vpop.xlane.xlu0 %2299
        %v2301 = vsel %vm556, %v2175, 0.0
        %2302 = vadd.xlane.f32.xlu0 %v2301
        %v2303 = vpop.xlane.xlu0 %2302
        %v2304 = vmul.f32 %v2210, %v653
        %v2305 = vmul.f32 %v2213, %v653
        %v2306 = vmul.f32 %v2216, %v653
        %v2307 = vmul.f32 %v2219, %v653
        %v2308 = vmul.f32 %v2222, %v653
        %v2309 = vmul.f32 %v2225, %v653
        %v2310 = vmul.f32 %v2228, %v653
        %v2311 = vmul.f32 %v2231, %v653
        %v2312 = vmul.f32 %v2234, %v653
        %v2313 = vmul.f32 %v2237, %v653
        %v2314 = vmul.f32 %v2240, %v653
        %v2315 = vmul.f32 %v2243, %v653
        %v2316 = vmul.f32 %v2246, %v653
        %v2317 = vmul.f32 %v2249, %v653
        %v2318 = vmul.f32 %v2252, %v653
        %v2319 = vmul.f32 %v2255, %v653
        %v2320 = vmul.f32 %v2258, %v653
        %v2321 = vmul.f32 %v2261, %v653
        %v2322 = vmul.f32 %v2264, %v653
        %v2323 = vmul.f32 %v2267, %v653
        %v2324 = vmul.f32 %v2270, %v653
        %v2325 = vmul.f32 %v2273, %v653
        %v2326 = vmul.f32 %v2276, %v653
        %v2327 = vmul.f32 %v2279, %v653
        %v2328 = vmul.f32 %v2282, %v653
        %v2329 = vmul.f32 %v2285, %v653
        %v2330 = vmul.f32 %v2288, %v653
        %v2331 = vmul.f32 %v2291, %v653
        %v2332 = vmul.f32 %v2294, %v653
        %v2333 = vmul.f32 %v2297, %v653
        %v2334 = vmul.f32 %v2300, %v653
        %v2335 = vmul.f32 %v2303, %v653
        %v2336 = vadd.f32 %v2304, 1e-05
        %v2337 = vadd.f32 %v2305, 1e-05
        %v2338 = vadd.f32 %v2306, 1e-05
        %v2339 = vadd.f32 %v2307, 1e-05
        %v2340 = vadd.f32 %v2308, 1e-05
        %v2341 = vadd.f32 %v2309, 1e-05
        %v2342 = vadd.f32 %v2310, 1e-05
        %v2343 = vadd.f32 %v2311, 1e-05
        %v2344 = vadd.f32 %v2312, 1e-05
        %v2345 = vadd.f32 %v2313, 1e-05
        %v2346 = vadd.f32 %v2314, 1e-05
        %v2347 = vadd.f32 %v2315, 1e-05
        %v2348 = vadd.f32 %v2316, 1e-05
        %v2349 = vadd.f32 %v2317, 1e-05
        %v2350 = vadd.f32 %v2318, 1e-05
        %v2351 = vadd.f32 %v2319, 1e-05
        %v2352 = vadd.f32 %v2320, 1e-05
        %v2353 = vadd.f32 %v2321, 1e-05
        %v2354 = vadd.f32 %v2322, 1e-05
        %v2355 = vadd.f32 %v2323, 1e-05
        %v2356 = vadd.f32 %v2324, 1e-05
        %v2357 = vadd.f32 %v2325, 1e-05
        %v2358 = vadd.f32 %v2326, 1e-05
        %v2359 = vadd.f32 %v2327, 1e-05
        %v2360 = vadd.f32 %v2328, 1e-05
        %v2361 = vadd.f32 %v2329, 1e-05
        %v2362 = vadd.f32 %v2330, 1e-05
        %v2363 = vadd.f32 %v2331, 1e-05
        %v2364 = vadd.f32 %v2332, 1e-05
        %v2365 = vadd.f32 %v2333, 1e-05
        %v2366 = vadd.f32 %v2334, 1e-05
        %v2367 = vadd.f32 %v2335, 1e-05
        %v2368 = vrsqrt.pop %v2336
        %v2369 = vrsqrt.pop %v2337
        %v2370 = vrsqrt.pop %v2338
        %v2371 = vrsqrt.pop %v2339
        %v2372 = vrsqrt.pop %v2340
        %v2373 = vrsqrt.pop %v2341
        %v2374 = vrsqrt.pop %v2342
        %v2375 = vrsqrt.pop %v2343
        %v2376 = vrsqrt.pop %v2344
        %v2377 = vrsqrt.pop %v2345
        %v2378 = vrsqrt.pop %v2346
        %v2379 = vrsqrt.pop %v2347
        %v2380 = vrsqrt.pop %v2348
        %v2381 = vrsqrt.pop %v2349
        %v2382 = vrsqrt.pop %v2350
        %v2383 = vrsqrt.pop %v2351
        %v2384 = vrsqrt.pop %v2352
        %v2385 = vrsqrt.pop %v2353
        %v2386 = vrsqrt.pop %v2354
        %v2387 = vrsqrt.pop %v2355
        %v2388 = vrsqrt.pop %v2356
        %v2389 = vrsqrt.pop %v2357
        %v2390 = vrsqrt.pop %v2358
        %v2391 = vrsqrt.pop %v2359
        %v2392 = vrsqrt.pop %v2360
        %v2393 = vrsqrt.pop %v2361
        %v2394 = vrsqrt.pop %v2362
        %v2395 = vrsqrt.pop %v2363
        %v2396 = vrsqrt.pop %v2364
        %v2397 = vrsqrt.pop %v2365
        %v2398 = vrsqrt.pop %v2366
        %v2399 = vrsqrt.pop %v2367
        %v2400 = vmul.f32 %v2016, %v2368
        %v2401 = vmul.f32 %v2017, %v2369
        %v2402 = vmul.f32 %v2018, %v2370
        %v2403 = vmul.f32 %v2019, %v2371
        %v2404 = vmul.f32 %v2020, %v2372
        %v2405 = vmul.f32 %v2021, %v2373
        %v2406 = vmul.f32 %v2022, %v2374
        %v2407 = vmul.f32 %v2023, %v2375
        %v2408 = vmul.f32 %v2024, %v2376
        %v2409 = vmul.f32 %v2025, %v2377
        %v2410 = vmul.f32 %v2026, %v2378
        %v2411 = vmul.f32 %v2027, %v2379
        %v2412 = vmul.f32 %v2028, %v2380
        %v2413 = vmul.f32 %v2029, %v2381
        %v2414 = vmul.f32 %v2030, %v2382
        %v2415 = vmul.f32 %v2031, %v2383
        %v2416 = vmul.f32 %v2032, %v2384
        %v2417 = vmul.f32 %v2033, %v2385
        %v2418 = vmul.f32 %v2034, %v2386
        %v2419 = vmul.f32 %v2035, %v2387
        %v2420 = vmul.f32 %v2036, %v2388
        %v2421 = vmul.f32 %v2037, %v2389
        %v2422 = vmul.f32 %v2038, %v2390
        %v2423 = vmul.f32 %v2039, %v2391
        %v2424 = vmul.f32 %v2040, %v2392
        %v2425 = vmul.f32 %v2041, %v2393
        %v2426 = vmul.f32 %v2042, %v2394
        %v2427 = vmul.f32 %v2043, %v2395
        %v2428 = vmul.f32 %v2044, %v2396
        %v2429 = vmul.f32 %v2045, %v2397
        %v2430 = vmul.f32 %v2046, %v2398
        %v2431 = vmul.f32 %v2047, %v2399
        %2432 = vrot.lane.b32.xlu0 %v978, 64
        %v2433 = vpop.permute.xlu0 %2432
        %v2435 = vmul.f32 %v2400, %v2433
        %v2436 = vmul.f32 %v2401, %v2433
        %v2437 = vmul.f32 %v2402, %v2433
        %v2438 = vmul.f32 %v2403, %v2433
        %v2439 = vmul.f32 %v2404, %v2433
        %v2440 = vmul.f32 %v2405, %v2433
        %v2441 = vmul.f32 %v2406, %v2433
        %v2442 = vmul.f32 %v2407, %v2433
        %v2443 = vmul.f32 %v2408, %v2433
        %v2444 = vmul.f32 %v2409, %v2433
        %v2445 = vmul.f32 %v2410, %v2433
        %v2446 = vmul.f32 %v2411, %v2433
        %v2447 = vmul.f32 %v2412, %v2433
        %v2448 = vmul.f32 %v2413, %v2433
        %v2449 = vmul.f32 %v2414, %v2433
        %v2450 = vmul.f32 %v2415, %v2433
        %v2451 = vmul.f32 %v2416, %v2433
        %v2452 = vmul.f32 %v2417, %v2433
        %v2453 = vmul.f32 %v2418, %v2433
        %v2454 = vmul.f32 %v2419, %v2433
        %v2455 = vmul.f32 %v2420, %v2433
        %v2456 = vmul.f32 %v2421, %v2433
        %v2457 = vmul.f32 %v2422, %v2433
        %v2458 = vmul.f32 %v2423, %v2433
        %v2459 = vmul.f32 %v2424, %v2433
        %v2460 = vmul.f32 %v2425, %v2433
        %v2461 = vmul.f32 %v2426, %v2433
        %v2462 = vmul.f32 %v2427, %v2433
        %v2463 = vmul.f32 %v2428, %v2433
        %v2464 = vmul.f32 %v2429, %v2433
        %v2465 = vmul.f32 %v2430, %v2433
        %v2466 = vmul.f32 %v2431, %v2433
        %2467 = vrot.lane.b32.xlu0 %v1016, 64
        %v2468 = vpop.permute.xlu0 %2467
        %v2470 = vadd.f32 %v2435, %v2468
        %v2471 = vadd.f32 %v2436, %v2468
        %v2472 = vadd.f32 %v2437, %v2468
        %v2473 = vadd.f32 %v2438, %v2468
        %v2474 = vadd.f32 %v2439, %v2468
        %v2475 = vadd.f32 %v2440, %v2468
        %v2476 = vadd.f32 %v2441, %v2468
        %v2477 = vadd.f32 %v2442, %v2468
        %v2478 = vadd.f32 %v2443, %v2468
        %v2479 = vadd.f32 %v2444, %v2468
        %v2480 = vadd.f32 %v2445, %v2468
        %v2481 = vadd.f32 %v2446, %v2468
        %v2482 = vadd.f32 %v2447, %v2468
        %v2483 = vadd.f32 %v2448, %v2468
        %v2484 = vadd.f32 %v2449, %v2468
        %v2485 = vadd.f32 %v2450, %v2468
        %v2486 = vadd.f32 %v2451, %v2468
        %v2487 = vadd.f32 %v2452, %v2468
        %v2488 = vadd.f32 %v2453, %v2468
        %v2489 = vadd.f32 %v2454, %v2468
        %v2490 = vadd.f32 %v2455, %v2468
        %v2491 = vadd.f32 %v2456, %v2468
        %v2492 = vadd.f32 %v2457, %v2468
        %v2493 = vadd.f32 %v2458, %v2468
        %v2494 = vadd.f32 %v2459, %v2468
        %v2495 = vadd.f32 %v2460, %v2468
        %v2496 = vadd.f32 %v2461, %v2468
        %v2497 = vadd.f32 %v2462, %v2468
        %v2498 = vadd.f32 %v2463, %v2468
        %v2499 = vadd.f32 %v2464, %v2468
        %v2500 = vadd.f32 %v2465, %v2468
        %v2501 = vadd.f32 %v2466, %v2468
        %2502 = vrot.lane.b32.xlu0 %v428, 32
        %v2503 = vpop.permute.xlu0 %2502
        %2504 = vrot.lane.b32.xlu0 %v431, 32
        %v2505 = vpop.permute.xlu0 %2504
        %2506 = vrot.lane.b32.xlu0 %v436, 32
        %v2507 = vpop.permute.xlu0 %2506
        %2508 = vrot.lane.b32.xlu0 %v439, 32
        %v2509 = vpop.permute.xlu0 %2508
        %2510 = vrot.lane.b32.xlu0 %v444, 32
        %v2511 = vpop.permute.xlu0 %2510
        %2512 = vrot.lane.b32.xlu0 %v447, 32
        %v2513 = vpop.permute.xlu0 %2512
        %2514 = vrot.lane.b32.xlu0 %v452, 32
        %v2515 = vpop.permute.xlu0 %2514
        %2516 = vrot.lane.b32.xlu0 %v455, 32
        %v2517 = vpop.permute.xlu0 %2516
        %2518 = vrot.lane.b32.xlu0 %v460, 32
        %v2519 = vpop.permute.xlu0 %2518
        %2520 = vrot.lane.b32.xlu0 %v463, 32
        %v2521 = vpop.permute.xlu0 %2520
        %2522 = vrot.lane.b32.xlu0 %v468, 32
        %v2523 = vpop.permute.xlu0 %2522
        %2524 = vrot.lane.b32.xlu0 %v471, 32
        %v2525 = vpop.permute.xlu0 %2524
        %2526 = vrot.lane.b32.xlu0 %v476, 32
        %v2527 = vpop.permute.xlu0 %2526
        %2528 = vrot.lane.b32.xlu0 %v479, 32
        %v2529 = vpop.permute.xlu0 %2528
        %2530 = vrot.lane.b32.xlu0 %v484, 32
        %v2531 = vpop.permute.xlu0 %2530
        %2532 = vrot.lane.b32.xlu0 %v487, 32
        %v2533 = vpop.permute.xlu0 %2532
        %2534 = vrot.lane.b32.xlu0 %v492, 32
        %v2535 = vpop.permute.xlu0 %2534
        %2536 = vrot.lane.b32.xlu0 %v495, 32
        %v2537 = vpop.permute.xlu0 %2536
        %2538 = vrot.lane.b32.xlu0 %v500, 32
        %v2539 = vpop.permute.xlu0 %2538
        %2540 = vrot.lane.b32.xlu0 %v503, 32
        %v2541 = vpop.permute.xlu0 %2540
        %2542 = vrot.lane.b32.xlu0 %v508, 32
        %v2543 = vpop.permute.xlu0 %2542
        %2544 = vrot.lane.b32.xlu0 %v511, 32
        %v2545 = vpop.permute.xlu0 %2544
        %2546 = vrot.lane.b32.xlu0 %v516, 32
        %v2547 = vpop.permute.xlu0 %2546
        %2548 = vrot.lane.b32.xlu0 %v519, 32
        %v2549 = vpop.permute.xlu0 %2548
        %2550 = vrot.lane.b32.xlu0 %v524, 32
        %v2551 = vpop.permute.xlu0 %2550
        %2552 = vrot.lane.b32.xlu0 %v527, 32
        %v2553 = vpop.permute.xlu0 %2552
        %2554 = vrot.lane.b32.xlu0 %v532, 32
        %v2555 = vpop.permute.xlu0 %2554
        %2556 = vrot.lane.b32.xlu0 %v535, 32
        %v2557 = vpop.permute.xlu0 %2556
        %2558 = vrot.lane.b32.xlu0 %v540, 32
        %v2559 = vpop.permute.xlu0 %2558
        %2560 = vrot.lane.b32.xlu0 %v543, 32
        %v2561 = vpop.permute.xlu0 %2560
        %2562 = vrot.lane.b32.xlu0 %v548, 32
        %v2563 = vpop.permute.xlu0 %2562
        %2564 = vrot.lane.b32.xlu0 %v551, 32
        %v2565 = vpop.permute.xlu0 %2564
        %v2598 = vsel %vm556, %v2503, 0.0
        %2599 = vadd.xlane.f32.xlu0 %v2598
        %v2600 = vpop.xlane.xlu0 %2599
        %v2601 = vsel %vm556, %v2505, 0.0
        %2602 = vadd.xlane.f32.xlu0 %v2601
        %v2603 = vpop.xlane.xlu0 %2602
        %v2604 = vsel %vm556, %v2507, 0.0
        %2605 = vadd.xlane.f32.xlu0 %v2604
        %v2606 = vpop.xlane.xlu0 %2605
        %v2607 = vsel %vm556, %v2509, 0.0
        %2608 = vadd.xlane.f32.xlu0 %v2607
        %v2609 = vpop.xlane.xlu0 %2608
        %v2610 = vsel %vm556, %v2511, 0.0
        %2611 = vadd.xlane.f32.xlu0 %v2610
        %v2612 = vpop.xlane.xlu0 %2611
        %v2613 = vsel %vm556, %v2513, 0.0
        %2614 = vadd.xlane.f32.xlu0 %v2613
        %v2615 = vpop.xlane.xlu0 %2614
        %v2616 = vsel %vm556, %v2515, 0.0
        %2617 = vadd.xlane.f32.xlu0 %v2616
        %v2618 = vpop.xlane.xlu0 %2617
        %v2619 = vsel %vm556, %v2517, 0.0
        %2620 = vadd.xlane.f32.xlu0 %v2619
        %v2621 = vpop.xlane.xlu0 %2620
        %v2622 = vsel %vm556, %v2519, 0.0
        %2623 = vadd.xlane.f32.xlu0 %v2622
        %v2624 = vpop.xlane.xlu0 %2623
        %v2625 = vsel %vm556, %v2521, 0.0
        %2626 = vadd.xlane.f32.xlu0 %v2625
        %v2627 = vpop.xlane.xlu0 %2626
        %v2628 = vsel %vm556, %v2523, 0.0
        %2629 = vadd.xlane.f32.xlu0 %v2628
        %v2630 = vpop.xlane.xlu0 %2629
        %v2631 = vsel %vm556, %v2525, 0.0
        %2632 = vadd.xlane.f32.xlu0 %v2631
        %v2633 = vpop.xlane.xlu0 %2632
        %v2634 = vsel %vm556, %v2527, 0.0
        %2635 = vadd.xlane.f32.xlu0 %v2634
        %v2636 = vpop.xlane.xlu0 %2635
        %v2637 = vsel %vm556, %v2529, 0.0
        %2638 = vadd.xlane.f32.xlu0 %v2637
        %v2639 = vpop.xlane.xlu0 %2638
        %v2640 = vsel %vm556, %v2531, 0.0
        %2641 = vadd.xlane.f32.xlu0 %v2640
        %v2642 = vpop.xlane.xlu0 %2641
        %v2643 = vsel %vm556, %v2533, 0.0
        %2644 = vadd.xlane.f32.xlu0 %v2643
        %v2645 = vpop.xlane.xlu0 %2644
        %v2646 = vsel %vm556, %v2535, 0.0
        %2647 = vadd.xlane.f32.xlu0 %v2646
        %v2648 = vpop.xlane.xlu0 %2647
        %v2649 = vsel %vm556, %v2537, 0.0
        %2650 = vadd.xlane.f32.xlu0 %v2649
        %v2651 = vpop.xlane.xlu0 %2650
        %v2652 = vsel %vm556, %v2539, 0.0
        %2653 = vadd.xlane.f32.xlu0 %v2652
        %v2654 = vpop.xlane.xlu0 %2653
        %v2655 = vsel %vm556, %v2541, 0.0
        %2656 = vadd.xlane.f32.xlu0 %v2655
        %v2657 = vpop.xlane.xlu0 %2656
        %v2658 = vsel %vm556, %v2543, 0.0
        %2659 = vadd.xlane.f32.xlu0 %v2658
        %v2660 = vpop.xlane.xlu0 %2659
        %v2661 = vsel %vm556, %v2545, 0.0
        %2662 = vadd.xlane.f32.xlu0 %v2661
        %v2663 = vpop.xlane.xlu0 %2662
        %v2664 = vsel %vm556, %v2547, 0.0
        %2665 = vadd.xlane.f32.xlu0 %v2664
        %v2666 = vpop.xlane.xlu0 %2665
        %v2667 = vsel %vm556, %v2549, 0.0
        %2668 = vadd.xlane.f32.xlu0 %v2667
        %v2669 = vpop.xlane.xlu0 %2668
        %v2670 = vsel %vm556, %v2551, 0.0
        %2671 = vadd.xlane.f32.xlu0 %v2670
        %v2672 = vpop.xlane.xlu0 %2671
        %v2673 = vsel %vm556, %v2553, 0.0
        %2674 = vadd.xlane.f32.xlu0 %v2673
        %v2675 = vpop.xlane.xlu0 %2674
        %v2676 = vsel %vm556, %v2555, 0.0
        %2677 = vadd.xlane.f32.xlu0 %v2676
        %v2678 = vpop.xlane.xlu0 %2677
        %v2679 = vsel %vm556, %v2557, 0.0
        %2680 = vadd.xlane.f32.xlu0 %v2679
        %v2681 = vpop.xlane.xlu0 %2680
        %v2682 = vsel %vm556, %v2559, 0.0
        %2683 = vadd.xlane.f32.xlu0 %v2682
        %v2684 = vpop.xlane.xlu0 %2683
        %v2685 = vsel %vm556, %v2561, 0.0
        %2686 = vadd.xlane.f32.xlu0 %v2685
        %v2687 = vpop.xlane.xlu0 %2686
        %v2688 = vsel %vm556, %v2563, 0.0
        %2689 = vadd.xlane.f32.xlu0 %v2688
        %v2690 = vpop.xlane.xlu0 %2689
        %v2691 = vsel %vm556, %v2565, 0.0
        %2692 = vadd.xlane.f32.xlu0 %v2691
        %v2693 = vpop.xlane.xlu0 %2692
        %v2694 = vmul.f32 %v2600, %v653
        %v2695 = vmul.f32 %v2603, %v653
        %v2696 = vmul.f32 %v2606, %v653
        %v2697 = vmul.f32 %v2609, %v653
        %v2698 = vmul.f32 %v2612, %v653
        %v2699 = vmul.f32 %v2615, %v653
        %v2700 = vmul.f32 %v2618, %v653
        %v2701 = vmul.f32 %v2621, %v653
        %v2702 = vmul.f32 %v2624, %v653
        %v2703 = vmul.f32 %v2627, %v653
        %v2704 = vmul.f32 %v2630, %v653
        %v2705 = vmul.f32 %v2633, %v653
        %v2706 = vmul.f32 %v2636, %v653
        %v2707 = vmul.f32 %v2639, %v653
        %v2708 = vmul.f32 %v2642, %v653
        %v2709 = vmul.f32 %v2645, %v653
        %v2710 = vmul.f32 %v2648, %v653
        %v2711 = vmul.f32 %v2651, %v653
        %v2712 = vmul.f32 %v2654, %v653
        %v2713 = vmul.f32 %v2657, %v653
        %v2714 = vmul.f32 %v2660, %v653
        %v2715 = vmul.f32 %v2663, %v653
        %v2716 = vmul.f32 %v2666, %v653
        %v2717 = vmul.f32 %v2669, %v653
        %v2718 = vmul.f32 %v2672, %v653
        %v2719 = vmul.f32 %v2675, %v653
        %v2720 = vmul.f32 %v2678, %v653
        %v2721 = vmul.f32 %v2681, %v653
        %v2722 = vmul.f32 %v2684, %v653
        %v2723 = vmul.f32 %v2687, %v653
        %v2724 = vmul.f32 %v2690, %v653
        %v2725 = vmul.f32 %v2693, %v653
        %v2726 = vsub.f32 %v428, %v2694
        %v2727 = vsub.f32 %v431, %v2695
        %v2728 = vsub.f32 %v436, %v2696
        %v2729 = vsub.f32 %v439, %v2697
        %v2730 = vsub.f32 %v444, %v2698
        %v2731 = vsub.f32 %v447, %v2699
        %v2732 = vsub.f32 %v452, %v2700
        %v2733 = vsub.f32 %v455, %v2701
        %v2734 = vsub.f32 %v460, %v2702
        %v2735 = vsub.f32 %v463, %v2703
        %v2736 = vsub.f32 %v468, %v2704
        %v2737 = vsub.f32 %v471, %v2705
        %v2738 = vsub.f32 %v476, %v2706
        %v2739 = vsub.f32 %v479, %v2707
        %v2740 = vsub.f32 %v484, %v2708
        %v2741 = vsub.f32 %v487, %v2709
        %v2742 = vsub.f32 %v492, %v2710
        %v2743 = vsub.f32 %v495, %v2711
        %v2744 = vsub.f32 %v500, %v2712
        %v2745 = vsub.f32 %v503, %v2713
        %v2746 = vsub.f32 %v508, %v2714
        %v2747 = vsub.f32 %v511, %v2715
        %v2748 = vsub.f32 %v516, %v2716
        %v2749 = vsub.f32 %v519, %v2717
        %v2750 = vsub.f32 %v524, %v2718
        %v2751 = vsub.f32 %v527, %v2719
        %v2752 = vsub.f32 %v532, %v2720
        %v2753 = vsub.f32 %v535, %v2721
        %v2754 = vsub.f32 %v540, %v2722
        %v2755 = vsub.f32 %v543, %v2723
        %v2756 = vsub.f32 %v548, %v2724
        %v2757 = vsub.f32 %v551, %v2725
        %v2758 = vmul.f32 %v2726, %v2726
        %v2759 = vmul.f32 %v2727, %v2727
        %v2760 = vmul.f32 %v2728, %v2728
        %v2761 = vmul.f32 %v2729, %v2729
        %v2762 = vmul.f32 %v2730, %v2730
        %v2763 = vmul.f32 %v2731, %v2731
        %v2764 = vmul.f32 %v2732, %v2732
        %v2765 = vmul.f32 %v2733, %v2733
        %v2766 = vmul.f32 %v2734, %v2734
        %v2767 = vmul.f32 %v2735, %v2735
        %v2768 = vmul.f32 %v2736, %v2736
        %v2769 = vmul.f32 %v2737, %v2737
        %v2770 = vmul.f32 %v2738, %v2738
        %v2771 = vmul.f32 %v2739, %v2739
        %v2772 = vmul.f32 %v2740, %v2740
        %v2773 = vmul.f32 %v2741, %v2741
        %v2774 = vmul.f32 %v2742, %v2742
        %v2775 = vmul.f32 %v2743, %v2743
        %v2776 = vmul.f32 %v2744, %v2744
        %v2777 = vmul.f32 %v2745, %v2745
        %v2778 = vmul.f32 %v2746, %v2746
        %v2779 = vmul.f32 %v2747, %v2747
        %v2780 = vmul.f32 %v2748, %v2748
        %v2781 = vmul.f32 %v2749, %v2749
        %v2782 = vmul.f32 %v2750, %v2750
        %v2783 = vmul.f32 %v2751, %v2751
        %v2784 = vmul.f32 %v2752, %v2752
        %v2785 = vmul.f32 %v2753, %v2753
        %v2786 = vmul.f32 %v2754, %v2754
        %v2787 = vmul.f32 %v2755, %v2755
        %v2788 = vmul.f32 %v2756, %v2756
        %v2789 = vmul.f32 %v2757, %v2757
        %2822 = vrot.lane.b32.xlu0 %v2758, 32
        %v2823 = vpop.permute.xlu0 %2822
        %2824 = vrot.lane.b32.xlu0 %v2759, 32
        %v2825 = vpop.permute.xlu0 %2824
        %2826 = vrot.lane.b32.xlu0 %v2760, 32
        %v2827 = vpop.permute.xlu0 %2826
        %2828 = vrot.lane.b32.xlu0 %v2761, 32
        %v2829 = vpop.permute.xlu0 %2828
        %2830 = vrot.lane.b32.xlu0 %v2762, 32
        %v2831 = vpop.permute.xlu0 %2830
        %2832 = vrot.lane.b32.xlu0 %v2763, 32
        %v2833 = vpop.permute.xlu0 %2832
        %2834 = vrot.lane.b32.xlu0 %v2764, 32
        %v2835 = vpop.permute.xlu0 %2834
        %2836 = vrot.lane.b32.xlu0 %v2765, 32
        %v2837 = vpop.permute.xlu0 %2836
        %2838 = vrot.lane.b32.xlu0 %v2766, 32
        %v2839 = vpop.permute.xlu0 %2838
        %2840 = vrot.lane.b32.xlu0 %v2767, 32
        %v2841 = vpop.permute.xlu0 %2840
        %2842 = vrot.lane.b32.xlu0 %v2768, 32
        %v2843 = vpop.permute.xlu0 %2842
        %2844 = vrot.lane.b32.xlu0 %v2769, 32
        %v2845 = vpop.permute.xlu0 %2844
        %2846 = vrot.lane.b32.xlu0 %v2770, 32
        %v2847 = vpop.permute.xlu0 %2846
        %2848 = vrot.lane.b32.xlu0 %v2771, 32
        %v2849 = vpop.permute.xlu0 %2848
        %2850 = vrot.lane.b32.xlu0 %v2772, 32
        %v2851 = vpop.permute.xlu0 %2850
        %2852 = vrot.lane.b32.xlu0 %v2773, 32
        %v2853 = vpop.permute.xlu0 %2852
        %2854 = vrot.lane.b32.xlu0 %v2774, 32
        %v2855 = vpop.permute.xlu0 %2854
        %2856 = vrot.lane.b32.xlu0 %v2775, 32
        %v2857 = vpop.permute.xlu0 %2856
        %2858 = vrot.lane.b32.xlu0 %v2776, 32
        %v2859 = vpop.permute.xlu0 %2858
        %2860 = vrot.lane.b32.xlu0 %v2777, 32
        %v2861 = vpop.permute.xlu0 %2860
        %2862 = vrot.lane.b32.xlu0 %v2778, 32
        %v2863 = vpop.permute.xlu0 %2862
        %2864 = vrot.lane.b32.xlu0 %v2779, 32
        %v2865 = vpop.permute.xlu0 %2864
        %2866 = vrot.lane.b32.xlu0 %v2780, 32
        %v2867 = vpop.permute.xlu0 %2866
        %2868 = vrot.lane.b32.xlu0 %v2781, 32
        %v2869 = vpop.permute.xlu0 %2868
        %2870 = vrot.lane.b32.xlu0 %v2782, 32
        %v2871 = vpop.permute.xlu0 %2870
        %2872 = vrot.lane.b32.xlu0 %v2783, 32
        %v2873 = vpop.permute.xlu0 %2872
        %2874 = vrot.lane.b32.xlu0 %v2784, 32
        %v2875 = vpop.permute.xlu0 %2874
        %2876 = vrot.lane.b32.xlu0 %v2785, 32
        %v2877 = vpop.permute.xlu0 %2876
        %2878 = vrot.lane.b32.xlu0 %v2786, 32
        %v2879 = vpop.permute.xlu0 %2878
        %2880 = vrot.lane.b32.xlu0 %v2787, 32
        %v2881 = vpop.permute.xlu0 %2880
        %2882 = vrot.lane.b32.xlu0 %v2788, 32
        %v2883 = vpop.permute.xlu0 %2882
        %2884 = vrot.lane.b32.xlu0 %v2789, 32
        %v2885 = vpop.permute.xlu0 %2884
        %v2918 = vsel %vm556, %v2823, 0.0
        %2919 = vadd.xlane.f32.xlu0 %v2918
        %v2920 = vpop.xlane.xlu0 %2919
        %v2921 = vsel %vm556, %v2825, 0.0
        %2922 = vadd.xlane.f32.xlu0 %v2921
        %v2923 = vpop.xlane.xlu0 %2922
        %v2924 = vsel %vm556, %v2827, 0.0
        %2925 = vadd.xlane.f32.xlu0 %v2924
        %v2926 = vpop.xlane.xlu0 %2925
        %v2927 = vsel %vm556, %v2829, 0.0
        %2928 = vadd.xlane.f32.xlu0 %v2927
        %v2929 = vpop.xlane.xlu0 %2928
        %v2930 = vsel %vm556, %v2831, 0.0
        %2931 = vadd.xlane.f32.xlu0 %v2930
        %v2932 = vpop.xlane.xlu0 %2931
        %v2933 = vsel %vm556, %v2833, 0.0
        %2934 = vadd.xlane.f32.xlu0 %v2933
        %v2935 = vpop.xlane.xlu0 %2934
        %v2936 = vsel %vm556, %v2835, 0.0
        %2937 = vadd.xlane.f32.xlu0 %v2936
        %v2938 = vpop.xlane.xlu0 %2937
        %v2939 = vsel %vm556, %v2837, 0.0
        %2940 = vadd.xlane.f32.xlu0 %v2939
        %v2941 = vpop.xlane.xlu0 %2940
        %v2942 = vsel %vm556, %v2839, 0.0
        %2943 = vadd.xlane.f32.xlu0 %v2942
        %v2944 = vpop.xlane.xlu0 %2943
        %v2945 = vsel %vm556, %v2841, 0.0
        %2946 = vadd.xlane.f32.xlu0 %v2945
        %v2947 = vpop.xlane.xlu0 %2946
        %v2948 = vsel %vm556, %v2843, 0.0
        %2949 = vadd.xlane.f32.xlu0 %v2948
        %v2950 = vpop.xlane.xlu0 %2949
        %v2951 = vsel %vm556, %v2845, 0.0
        %2952 = vadd.xlane.f32.xlu0 %v2951
        %v2953 = vpop.xlane.xlu0 %2952
        %v2954 = vsel %vm556, %v2847, 0.0
        %2955 = vadd.xlane.f32.xlu0 %v2954
        %v2956 = vpop.xlane.xlu0 %2955
        %v2957 = vsel %vm556, %v2849, 0.0
        %2958 = vadd.xlane.f32.xlu0 %v2957
        %v2959 = vpop.xlane.xlu0 %2958
        %v2960 = vsel %vm556, %v2851, 0.0
        %2961 = vadd.xlane.f32.xlu0 %v2960
        %v2962 = vpop.xlane.xlu0 %2961
        %v2963 = vsel %vm556, %v2853, 0.0
        %2964 = vadd.xlane.f32.xlu0 %v2963
        %v2965 = vpop.xlane.xlu0 %2964
        %v2966 = vsel %vm556, %v2855, 0.0
        %2967 = vadd.xlane.f32.xlu0 %v2966
        %v2968 = vpop.xlane.xlu0 %2967
        %v2969 = vsel %vm556, %v2857, 0.0
        %2970 = vadd.xlane.f32.xlu0 %v2969
        %v2971 = vpop.xlane.xlu0 %2970
        %v2972 = vsel %vm556, %v2859, 0.0
        %2973 = vadd.xlane.f32.xlu0 %v2972
        %v2974 = vpop.xlane.xlu0 %2973
        %v2975 = vsel %vm556, %v2861, 0.0
        %2976 = vadd.xlane.f32.xlu0 %v2975
        %v2977 = vpop.xlane.xlu0 %2976
        %v2978 = vsel %vm556, %v2863, 0.0
        %2979 = vadd.xlane.f32.xlu0 %v2978
        %v2980 = vpop.xlane.xlu0 %2979
        %v2981 = vsel %vm556, %v2865, 0.0
        %2982 = vadd.xlane.f32.xlu0 %v2981
        %v2983 = vpop.xlane.xlu0 %2982
        %v2984 = vsel %vm556, %v2867, 0.0
        %2985 = vadd.xlane.f32.xlu0 %v2984
        %v2986 = vpop.xlane.xlu0 %2985
        %v2987 = vsel %vm556, %v2869, 0.0
        %2988 = vadd.xlane.f32.xlu0 %v2987
        %v2989 = vpop.xlane.xlu0 %2988
        %v2990 = vsel %vm556, %v2871, 0.0
        %2991 = vadd.xlane.f32.xlu0 %v2990
        %v2992 = vpop.xlane.xlu0 %2991
        %v2993 = vsel %vm556, %v2873, 0.0
        %2994 = vadd.xlane.f32.xlu0 %v2993
        %v2995 = vpop.xlane.xlu0 %2994
        %v2996 = vsel %vm556, %v2875, 0.0
        %2997 = vadd.xlane.f32.xlu0 %v2996
        %v2998 = vpop.xlane.xlu0 %2997
        %v2999 = vsel %vm556, %v2877, 0.0
        %3000 = vadd.xlane.f32.xlu0 %v2999
        %v3001 = vpop.xlane.xlu0 %3000
        %v3002 = vsel %vm556, %v2879, 0.0
        %3003 = vadd.xlane.f32.xlu0 %v3002
        %v3004 = vpop.xlane.xlu0 %3003
        %v3005 = vsel %vm556, %v2881, 0.0
        %3006 = vadd.xlane.f32.xlu0 %v3005
        %v3007 = vpop.xlane.xlu0 %3006
        %v3008 = vsel %vm556, %v2883, 0.0
        %3009 = vadd.xlane.f32.xlu0 %v3008
        %v3010 = vpop.xlane.xlu0 %3009
        %v3011 = vsel %vm556, %v2885, 0.0
        %3012 = vadd.xlane.f32.xlu0 %v3011
        %v3013 = vpop.xlane.xlu0 %3012
        %v3014 = vmul.f32 %v2920, %v653
        %v3015 = vmul.f32 %v2923, %v653
        %v3016 = vmul.f32 %v2926, %v653
        %v3017 = vmul.f32 %v2929, %v653
        %v3018 = vmul.f32 %v2932, %v653
        %v3019 = vmul.f32 %v2935, %v653
        %v3020 = vmul.f32 %v2938, %v653
        %v3021 = vmul.f32 %v2941, %v653
        %v3022 = vmul.f32 %v2944, %v653
        %v3023 = vmul.f32 %v2947, %v653
        %v3024 = vmul.f32 %v2950, %v653
        %v3025 = vmul.f32 %v2953, %v653
        %v3026 = vmul.f32 %v2956, %v653
        %v3027 = vmul.f32 %v2959, %v653
        %v3028 = vmul.f32 %v2962, %v653
        %v3029 = vmul.f32 %v2965, %v653
        %v3030 = vmul.f32 %v2968, %v653
        %v3031 = vmul.f32 %v2971, %v653
        %v3032 = vmul.f32 %v2974, %v653
        %v3033 = vmul.f32 %v2977, %v653
        %v3034 = vmul.f32 %v2980, %v653
        %v3035 = vmul.f32 %v2983, %v653
        %v3036 = vmul.f32 %v2986, %v653
        %v3037 = vmul.f32 %v2989, %v653
        %v3038 = vmul.f32 %v2992, %v653
        %v3039 = vmul.f32 %v2995, %v653
        %v3040 = vmul.f32 %v2998, %v653
        %v3041 = vmul.f32 %v3001, %v653
        %v3042 = vmul.f32 %v3004, %v653
        %v3043 = vmul.f32 %v3007, %v653
        %v3044 = vmul.f32 %v3010, %v653
        %v3045 = vmul.f32 %v3013, %v653
        %v3046 = vadd.f32 %v3014, 1e-05
        %v3047 = vadd.f32 %v3015, 1e-05
        %v3048 = vadd.f32 %v3016, 1e-05
        %v3049 = vadd.f32 %v3017, 1e-05
        %v3050 = vadd.f32 %v3018, 1e-05
        %v3051 = vadd.f32 %v3019, 1e-05
        %v3052 = vadd.f32 %v3020, 1e-05
        %v3053 = vadd.f32 %v3021, 1e-05
        %v3054 = vadd.f32 %v3022, 1e-05
        %v3055 = vadd.f32 %v3023, 1e-05
        %v3056 = vadd.f32 %v3024, 1e-05
        %v3057 = vadd.f32 %v3025, 1e-05
        %v3058 = vadd.f32 %v3026, 1e-05
        %v3059 = vadd.f32 %v3027, 1e-05
        %v3060 = vadd.f32 %v3028, 1e-05
        %v3061 = vadd.f32 %v3029, 1e-05
        %v3062 = vadd.f32 %v3030, 1e-05
        %v3063 = vadd.f32 %v3031, 1e-05
        %v3064 = vadd.f32 %v3032, 1e-05
        %v3065 = vadd.f32 %v3033, 1e-05
        %v3066 = vadd.f32 %v3034, 1e-05
        %v3067 = vadd.f32 %v3035, 1e-05
        %v3068 = vadd.f32 %v3036, 1e-05
        %v3069 = vadd.f32 %v3037, 1e-05
        %v3070 = vadd.f32 %v3038, 1e-05
        %v3071 = vadd.f32 %v3039, 1e-05
        %v3072 = vadd.f32 %v3040, 1e-05
        %v3073 = vadd.f32 %v3041, 1e-05
        %v3074 = vadd.f32 %v3042, 1e-05
        %v3075 = vadd.f32 %v3043, 1e-05
        %v3076 = vadd.f32 %v3044, 1e-05
        %v3077 = vadd.f32 %v3045, 1e-05
        %v3078 = vrsqrt.pop %v3046
        %v3079 = vrsqrt.pop %v3047
        %v3080 = vrsqrt.pop %v3048
        %v3081 = vrsqrt.pop %v3049
        %v3082 = vrsqrt.pop %v3050
        %v3083 = vrsqrt.pop %v3051
        %v3084 = vrsqrt.pop %v3052
        %v3085 = vrsqrt.pop %v3053
        %v3086 = vrsqrt.pop %v3054
        %v3087 = vrsqrt.pop %v3055
        %v3088 = vrsqrt.pop %v3056
        %v3089 = vrsqrt.pop %v3057
        %v3090 = vrsqrt.pop %v3058
        %v3091 = vrsqrt.pop %v3059
        %v3092 = vrsqrt.pop %v3060
        %v3093 = vrsqrt.pop %v3061
        %v3094 = vrsqrt.pop %v3062
        %v3095 = vrsqrt.pop %v3063
        %v3096 = vrsqrt.pop %v3064
        %v3097 = vrsqrt.pop %v3065
        %v3098 = vrsqrt.pop %v3066
        %v3099 = vrsqrt.pop %v3067
        %v3100 = vrsqrt.pop %v3068
        %v3101 = vrsqrt.pop %v3069
        %v3102 = vrsqrt.pop %v3070
        %v3103 = vrsqrt.pop %v3071
        %v3104 = vrsqrt.pop %v3072
        %v3105 = vrsqrt.pop %v3073
        %v3106 = vrsqrt.pop %v3074
        %v3107 = vrsqrt.pop %v3075
        %v3108 = vrsqrt.pop %v3076
        %v3109 = vrsqrt.pop %v3077
        %v3110 = vmul.f32 %v2726, %v3078
        %v3111 = vmul.f32 %v2727, %v3079
        %v3112 = vmul.f32 %v2728, %v3080
        %v3113 = vmul.f32 %v2729, %v3081
        %v3114 = vmul.f32 %v2730, %v3082
        %v3115 = vmul.f32 %v2731, %v3083
        %v3116 = vmul.f32 %v2732, %v3084
        %v3117 = vmul.f32 %v2733, %v3085
        %v3118 = vmul.f32 %v2734, %v3086
        %v3119 = vmul.f32 %v2735, %v3087
        %v3120 = vmul.f32 %v2736, %v3088
        %v3121 = vmul.f32 %v2737, %v3089
        %v3122 = vmul.f32 %v2738, %v3090
        %v3123 = vmul.f32 %v2739, %v3091
        %v3124 = vmul.f32 %v2740, %v3092
        %v3125 = vmul.f32 %v2741, %v3093
        %v3126 = vmul.f32 %v2742, %v3094
        %v3127 = vmul.f32 %v2743, %v3095
        %v3128 = vmul.f32 %v2744, %v3096
        %v3129 = vmul.f32 %v2745, %v3097
        %v3130 = vmul.f32 %v2746, %v3098
        %v3131 = vmul.f32 %v2747, %v3099
        %v3132 = vmul.f32 %v2748, %v3100
        %v3133 = vmul.f32 %v2749, %v3101
        %v3134 = vmul.f32 %v2750, %v3102
        %v3135 = vmul.f32 %v2751, %v3103
        %v3136 = vmul.f32 %v2752, %v3104
        %v3137 = vmul.f32 %v2753, %v3105
        %v3138 = vmul.f32 %v2754, %v3106
        %v3139 = vmul.f32 %v2755, %v3107
        %v3140 = vmul.f32 %v2756, %v3108
        %v3141 = vmul.f32 %v2757, %v3109
        %3142 = vrot.lane.b32.xlu0 %v978, 96
        %v3143 = vpop.permute.xlu0 %3142
        %v3145 = vmul.f32 %v3110, %v3143
        %v3146 = vmul.f32 %v3111, %v3143
        %v3147 = vmul.f32 %v3112, %v3143
        %v3148 = vmul.f32 %v3113, %v3143
        %v3149 = vmul.f32 %v3114, %v3143
        %v3150 = vmul.f32 %v3115, %v3143
        %v3151 = vmul.f32 %v3116, %v3143
        %v3152 = vmul.f32 %v3117, %v3143
        %v3153 = vmul.f32 %v3118, %v3143
        %v3154 = vmul.f32 %v3119, %v3143
        %v3155 = vmul.f32 %v3120, %v3143
        %v3156 = vmul.f32 %v3121, %v3143
        %v3157 = vmul.f32 %v3122, %v3143
        %v3158 = vmul.f32 %v3123, %v3143
        %v3159 = vmul.f32 %v3124, %v3143
        %v3160 = vmul.f32 %v3125, %v3143
        %v3161 = vmul.f32 %v3126, %v3143
        %v3162 = vmul.f32 %v3127, %v3143
        %v3163 = vmul.f32 %v3128, %v3143
        %v3164 = vmul.f32 %v3129, %v3143
        %v3165 = vmul.f32 %v3130, %v3143
        %v3166 = vmul.f32 %v3131, %v3143
        %v3167 = vmul.f32 %v3132, %v3143
        %v3168 = vmul.f32 %v3133, %v3143
        %v3169 = vmul.f32 %v3134, %v3143
        %v3170 = vmul.f32 %v3135, %v3143
        %v3171 = vmul.f32 %v3136, %v3143
        %v3172 = vmul.f32 %v3137, %v3143
        %v3173 = vmul.f32 %v3138, %v3143
        %v3174 = vmul.f32 %v3139, %v3143
        %v3175 = vmul.f32 %v3140, %v3143
        %v3176 = vmul.f32 %v3141, %v3143
        %3177 = vrot.lane.b32.xlu0 %v1016, 96
        %v3178 = vpop.permute.xlu0 %3177
        %v3180 = vadd.f32 %v3145, %v3178
        %v3181 = vadd.f32 %v3146, %v3178
        %v3182 = vadd.f32 %v3147, %v3178
        %v3183 = vadd.f32 %v3148, %v3178
        %v3184 = vadd.f32 %v3149, %v3178
        %v3185 = vadd.f32 %v3150, %v3178
        %v3186 = vadd.f32 %v3151, %v3178
        %v3187 = vadd.f32 %v3152, %v3178
        %v3188 = vadd.f32 %v3153, %v3178
        %v3189 = vadd.f32 %v3154, %v3178
        %v3190 = vadd.f32 %v3155, %v3178
        %v3191 = vadd.f32 %v3156, %v3178
        %v3192 = vadd.f32 %v3157, %v3178
        %v3193 = vadd.f32 %v3158, %v3178
        %v3194 = vadd.f32 %v3159, %v3178
        %v3195 = vadd.f32 %v3160, %v3178
        %v3196 = vadd.f32 %v3161, %v3178
        %v3197 = vadd.f32 %v3162, %v3178
        %v3198 = vadd.f32 %v3163, %v3178
        %v3199 = vadd.f32 %v3164, %v3178
        %v3200 = vadd.f32 %v3165, %v3178
        %v3201 = vadd.f32 %v3166, %v3178
        %v3202 = vadd.f32 %v3167, %v3178
        %v3203 = vadd.f32 %v3168, %v3178
        %v3204 = vadd.f32 %v3169, %v3178
        %v3205 = vadd.f32 %v3170, %v3178
        %v3206 = vadd.f32 %v3171, %v3178
        %v3207 = vadd.f32 %v3172, %v3178
        %v3208 = vadd.f32 %v3173, %v3178
        %v3209 = vadd.f32 %v3174, %v3178
        %v3210 = vadd.f32 %v3175, %v3178
        %v3211 = vadd.f32 %v3176, %v3178
        %v3212 = vsel %vm556, %v1018, %v1760
        %v3213 = vsel %vm556, %v1019, %v1761
        %v3214 = vsel %vm556, %v1020, %v1762
        %v3215 = vsel %vm556, %v1021, %v1763
        %v3216 = vsel %vm556, %v1022, %v1764
        %v3217 = vsel %vm556, %v1023, %v1765
        %v3218 = vsel %vm556, %v1024, %v1766
        %v3219 = vsel %vm556, %v1025, %v1767
        %v3220 = vsel %vm556, %v1026, %v1768
        %v3221 = vsel %vm556, %v1027, %v1769
        %v3222 = vsel %vm556, %v1028, %v1770
        %v3223 = vsel %vm556, %v1029, %v1771
        %v3224 = vsel %vm556, %v1030, %v1772
        %v3225 = vsel %vm556, %v1031, %v1773
        %v3226 = vsel %vm556, %v1032, %v1774
        %v3227 = vsel %vm556, %v1033, %v1775
        %v3228 = vsel %vm556, %v1034, %v1776
        %v3229 = vsel %vm556, %v1035, %v1777
        %v3230 = vsel %vm556, %v1036, %v1778
        %v3231 = vsel %vm556, %v1037, %v1779
        %v3232 = vsel %vm556, %v1038, %v1780
        %v3233 = vsel %vm556, %v1039, %v1781
        %v3234 = vsel %vm556, %v1040, %v1782
        %v3235 = vsel %vm556, %v1041, %v1783
        %v3236 = vsel %vm556, %v1042, %v1784
        %v3237 = vsel %vm556, %v1043, %v1785
        %v3238 = vsel %vm556, %v1044, %v1786
        %v3239 = vsel %vm556, %v1045, %v1787
        %v3240 = vsel %vm556, %v1046, %v1788
        %v3241 = vsel %vm556, %v1047, %v1789
        %v3242 = vsel %vm556, %v1048, %v1790
        %v3243 = vsel %vm556, %v1049, %v1791
        %v3244 = vsel %vm344, %v3212, %v2470
        %v3245 = vsel %vm344, %v3213, %v2471
        %v3246 = vsel %vm344, %v3214, %v2472
        %v3247 = vsel %vm344, %v3215, %v2473
        %v3248 = vsel %vm344, %v3216, %v2474
        %v3249 = vsel %vm344, %v3217, %v2475
        %v3250 = vsel %vm344, %v3218, %v2476
        %v3251 = vsel %vm344, %v3219, %v2477
        %v3252 = vsel %vm344, %v3220, %v2478
        %v3253 = vsel %vm344, %v3221, %v2479
        %v3254 = vsel %vm344, %v3222, %v2480
        %v3255 = vsel %vm344, %v3223, %v2481
        %v3256 = vsel %vm344, %v3224, %v2482
        %v3257 = vsel %vm344, %v3225, %v2483
        %v3258 = vsel %vm344, %v3226, %v2484
        %v3259 = vsel %vm344, %v3227, %v2485
        %v3260 = vsel %vm344, %v3228, %v2486
        %v3261 = vsel %vm344, %v3229, %v2487
        %v3262 = vsel %vm344, %v3230, %v2488
        %v3263 = vsel %vm344, %v3231, %v2489
        %v3264 = vsel %vm344, %v3232, %v2490
        %v3265 = vsel %vm344, %v3233, %v2491
        %v3266 = vsel %vm344, %v3234, %v2492
        %v3267 = vsel %vm344, %v3235, %v2493
        %v3268 = vsel %vm344, %v3236, %v2494
        %v3269 = vsel %vm344, %v3237, %v2495
        %v3270 = vsel %vm344, %v3238, %v2496
        %v3271 = vsel %vm344, %v3239, %v2497
        %v3272 = vsel %vm344, %v3240, %v2498
        %v3273 = vsel %vm344, %v3241, %v2499
        %v3274 = vsel %vm344, %v3242, %v2500
        %v3275 = vsel %vm344, %v3243, %v2501
        %vm3276 = vcmask 785408
        %v3277 = vsel %vm3276, %v3244, %v3180
        %v3278 = vsel %vm3276, %v3245, %v3181
        %v3279 = vsel %vm3276, %v3246, %v3182
        %v3280 = vsel %vm3276, %v3247, %v3183
        %v3281 = vsel %vm3276, %v3248, %v3184
        %v3282 = vsel %vm3276, %v3249, %v3185
        %v3283 = vsel %vm3276, %v3250, %v3186
        %v3284 = vsel %vm3276, %v3251, %v3187
        %v3285 = vsel %vm3276, %v3252, %v3188
        %v3286 = vsel %vm3276, %v3253, %v3189
        %v3287 = vsel %vm3276, %v3254, %v3190
        %v3288 = vsel %vm3276, %v3255, %v3191
        %v3289 = vsel %vm3276, %v3256, %v3192
        %v3290 = vsel %vm3276, %v3257, %v3193
        %v3291 = vsel %vm3276, %v3258, %v3194
        %v3292 = vsel %vm3276, %v3259, %v3195
        %v3293 = vsel %vm3276, %v3260, %v3196
        %v3294 = vsel %vm3276, %v3261, %v3197
        %v3295 = vsel %vm3276, %v3262, %v3198
        %v3296 = vsel %vm3276, %v3263, %v3199
        %v3297 = vsel %vm3276, %v3264, %v3200
        %v3298 = vsel %vm3276, %v3265, %v3201
        %v3299 = vsel %vm3276, %v3266, %v3202
        %v3300 = vsel %vm3276, %v3267, %v3203
        %v3301 = vsel %vm3276, %v3268, %v3204
        %v3302 = vsel %vm3276, %v3269, %v3205
        %v3303 = vsel %vm3276, %v3270, %v3206
        %v3304 = vsel %vm3276, %v3271, %v3207
        %v3305 = vsel %vm3276, %v3272, %v3208
        %v3306 = vsel %vm3276, %v3273, %v3209
        %v3307 = vsel %vm3276, %v3274, %v3210
        %v3308 = vsel %vm3276, %v3275, %v3211
        %3309 = vst [vmem:[%s191] sm:$0xff] %v3277
        %3310 = vst [vmem:[%s191 + $0x8] sm:$0xff] %v3278
        %3311 = vst [vmem:[%s191 + $0x10] sm:$0xff] %v3279
        %3312 = vst [vmem:[%s191 + $0x18] sm:$0xff] %v3280
        %3313 = vst [vmem:[%s191 + $0x20] sm:$0xff] %v3281
        %3314 = vst [vmem:[%s191 + $0x28] sm:$0xff] %v3282
        %3315 = vst [vmem:[%s191 + $0x30] sm:$0xff] %v3283
        %3316 = vst [vmem:[%s191 + $0x38] sm:$0xff] %v3284
        %3317 = vst [vmem:[%s191 + $0x40] sm:$0xff] %v3285
        %3318 = vst [vmem:[%s191 + $0x48] sm:$0xff] %v3286
        %3319 = vst [vmem:[%s191 + $0x50] sm:$0xff] %v3287
        %3320 = vst [vmem:[%s191 + $0x58] sm:$0xff] %v3288
        %3321 = vst [vmem:[%s191 + $0x60] sm:$0xff] %v3289
        %3322 = vst [vmem:[%s191 + $0x68] sm:$0xff] %v3290
        %3323 = vst [vmem:[%s191 + $0x70] sm:$0xff] %v3291
        %3324 = vst [vmem:[%s191 + $0x78] sm:$0xff] %v3292
        %3325 = vst [vmem:[%s191 + $0x80] sm:$0xff] %v3293
        %3326 = vst [vmem:[%s191 + $0x88] sm:$0xff] %v3294
        %3327 = vst [vmem:[%s191 + $0x90] sm:$0xff] %v3295
        %3328 = vst [vmem:[%s191 + $0x98] sm:$0xff] %v3296
        %3329 = vst [vmem:[%s191 + $0xa0] sm:$0xff] %v3297
        %3330 = vst [vmem:[%s191 + $0xa8] sm:$0xff] %v3298
        %3331 = vst [vmem:[%s191 + $0xb0] sm:$0xff] %v3299
        %3332 = vst [vmem:[%s191 + $0xb8] sm:$0xff] %v3300
        %3333 = vst [vmem:[%s191 + $0xc0] sm:$0xff] %v3301
        %3334 = vst [vmem:[%s191 + $0xc8] sm:$0xff] %v3302
        %3335 = vst [vmem:[%s191 + $0xd0] sm:$0xff] %v3303
        %3336 = vst [vmem:[%s191 + $0xd8] sm:$0xff] %v3304
        %3337 = vst [vmem:[%s191 + $0xe0] sm:$0xff] %v3305
        %3338 = vst [vmem:[%s191 + $0xe8] sm:$0xff] %v3306
        %3339 = vst [vmem:[%s191 + $0xf0] sm:$0xff] %v3307
        %3340 = vst [vmem:[%s191 + $0xf8] sm:$0xff] %v3308
        %s3341 = sand.u32 %s115, 1
        %s3342 = scalar_lea.sflag [#allocation3], %s3341
        %s3343 = sand.u32 %s115, 1
        %s3344 = smul.addr %s3343, 256
        %s3345 = scalar_lea.vmem [#allocation2], %s3344
        // Predicated region
        $region37: #{tpu_custom_call.1} parent=35 // pred_check
          %p3346 = pneg %p125
        $region38: #{tpu_custom_call.1} parent=35 // pred_check_branch
          %3348 = sbr.rel (%p3346) target = $region40
        $region39: #{tpu_custom_call.1} parent=35 // pred_region
          %s3349 = smul.u32 32, %s18
          %s3351 = ssub.s32 4096, 4096
          %3352 = vsyncadd %s3342, %s3351
          %s3353 = smul.addr %s3349, 128
          %s3354 = scalar_lea.hbm %s4, %s3353
          %s3355 = sshll.u32 %s3345, 4
          %s3356 = int_to_ptr.vmem [resolvable:$true] %s3355
          %3361 = dma.vmem_to_hbm [thread:$0]  %s3356, 4096, %s3354, %s3342, 128, 128, 8
        $region40: #{tpu_custom_call.1} parent=35 // pred_fallthru
          _
      $region36: #{tpu_custom_call.1} parent=5 // pred_fallthru
        _
      %p3362 = scmp.le.s32.totalorder 2, %s13
      // Predicated region
      $region41: #{tpu_custom_call.1} parent=5 // pred_check
        %p3363 = pneg %p3362
      $region42: #{tpu_custom_call.1} parent=5 // pred_check_branch
        %3365 = sbr.rel (%p3363) target = $region44
      $region43: #{tpu_custom_call.1} parent=5 // pred_region
        %s3366 = ssub.s32 %s13, 2
        // Predicated region
        $region45: #{tpu_custom_call.1} parent=43 // pred_check
          %p3367 = pneg %p131
        $region46: #{tpu_custom_call.1} parent=43 // pred_check_branch
          %3369 = sbr.rel (%p3367) target = $region48
        $region47: #{tpu_custom_call.1} parent=43 // pred_region
          %s3370 = sand.u32 %s116, 1
          %s3371 = scalar_lea.sflag [#allocation3], %s3370
          %s3372 = sand.u32 %s116, 1
          %s3373 = smul.addr %s3372, 256
          %s3374 = scalar_lea.vmem [#allocation2], %s3373
          %3375 = dma.done %s3371, 4096
        $region48: #{tpu_custom_call.1} parent=43 // pred_fallthru
          _
      $region44: #{tpu_custom_call.1} parent=5 // pred_fallthru
        _
    $region6: #{tpu_custom_call.1} parent=1 // loop_footer
      %s17 = sadd.s32 1, %s13
    $region7: #{tpu_custom_call.1} parent=1 // loop_footer_branch
      %12 = sbr.rel target = $region3
    $region8: #{tpu_custom_call.1} parent=1 // loop_exit
      _
    %3376 = vsyncpa [#allocation3], 1
    %s3377 = scalar_lea.sflag [#allocation3], 1
    %3378 = vsyncpa %s3377, 1

</llo_original>
